<compile_context>
chip_gen: v6e
topology: v6e:2x2x1
jax: 0.10.0
libtpu: 0.0.40
codegen_flags: <defaults>
</compile_context>

<pallas_src>
import functools

import jax
import jax.numpy as jnp
from jax import lax
from jax.experimental import pallas as pl
from jax.experimental.pallas import tpu as pltpu


def _round_up(x: int, m: int) -> int:
    return (x + m - 1) // m * m


D_IN, H1, H2, D_OUT = 28 * 28, 500, 256, 10
H1P = _round_up(H1, 128)     # 512
H2P = _round_up(H2, 128)     # 256 (already aligned)
OP = _round_up(D_OUT, 128)   # 128


def mlp_kernel(x_ref, w1_ref, b1_ref, w2_ref, b2_ref, w3_ref, b3_ref, t_ref,
               logits_ref, loss_ref, *, batch: int, tile_b: int, masked: bool):
    """One batch tile: 3 matmuls (bf16 in, f32 acc) + bias/ReLU + loss accum."""
    i = pl.program_id(0)

    x = x_ref[...]                                            # (tb, 784) bf16

    # fc1 + ReLU
    h1 = jnp.dot(x, w1_ref[...], preferred_element_type=jnp.float32) + b1_ref[...]
    h1 = jnp.maximum(h1, 0.0)

    # fc2 + ReLU
    h2 = jnp.dot(h1.astype(jnp.bfloat16), w2_ref[...],
                 preferred_element_type=jnp.float32) + b2_ref[...]
    h2 = jnp.maximum(h2, 0.0)

    # fc3 (logits)
    z = jnp.dot(h2.astype(jnp.bfloat16), w3_ref[...],
                preferred_element_type=jnp.float32) + b3_ref[...]
    logits_ref[...] = z

    # loss = sqrt(sum((logits - target)^2)).  Padded logit columns are exactly
    # zero (zero fc3 weight cols / bias entries) and padded target cols are
    # zero, so only padded *batch rows* ever need masking.
    d = z - t_ref[...]
    if masked:  # Python-static: only emitted when batch padding exists.
        rows = i * tile_b + lax.broadcasted_iota(jnp.int32, d.shape, 0)
        d = jnp.where(rows < batch, d, 0.0)

    @pl.when(i == 0)
    def _():
        loss_ref[...] = jnp.zeros_like(loss_ref)

    loss_ref[...] += jnp.sum(d * d)

    @pl.when(i == pl.num_programs(0) - 1)
    def _():
        loss_ref[...] = jnp.sqrt(loss_ref[...])


def init_params(key):
    """Deterministic Linear params, torch-style U(-1/sqrt(fan_in), 1/sqrt(fan_in))."""
    dims = [(D_IN, H1), (H1, H2), (H2, D_OUT)]
    params = []
    keys = jax.random.split(key, 2 * len(dims))
    for i, (fan_in, fan_out) in enumerate(dims):
        bound = 1.0 / jnp.sqrt(jnp.float32(fan_in))
        w = jax.random.uniform(keys[2 * i], (fan_in, fan_out), jnp.float32,
                               -bound, bound)
        b = jax.random.uniform(keys[2 * i + 1], (fan_out,), jnp.float32,
                               -bound, bound)
        params += [w, b]
    return tuple(params)  # (w1, b1, w2, b2, w3, b3)


def prepare_params(params):
    """Pad + cast params ONCE (outside the per-step jit): bf16 weights, f32 biases."""
    w1, b1, w2, b2, w3, b3 = params

    def padw(w, rows, cols):
        w = jnp.pad(w, ((0, rows - w.shape[0]), (0, cols - w.shape[1])))
        return w.astype(jnp.bfloat16)

    def padb(b, cols):
        b = b.reshape(1, -1).astype(jnp.float32)
        return jnp.pad(b, ((0, 0), (0, cols - b.shape[1])))

    return (padw(w1, D_IN, H1P), padb(b1, H1P),   # no 784->896 row pad on w1
            padw(w2, H1P, H2P), padb(b2, H2P),
            padw(w3, H2P, OP), padb(b3, OP))


def mlp_forward(x, target, prepared):
    """Equivalent of MLPNet.forward(x, target) -> (logits, loss)."""
    w1p, b1p, w2p, b2p, w3p, b3p = prepared
    B = x.shape[0]
    x2 = x.reshape(B, -1)
    assert x2.shape[1] == D_IN

    # Batch tiling: weights stay VMEM-resident across tiles; at B<=256 this is
    # a single-tile grid (no grid overhead for the small-batch case).
    TB = 256
    if B <= TB:
        Bp = _round_up(B, 8)
        tb = Bp
    else:
        Bp = _round_up(B, TB)
        tb = TB
    n_tiles = Bp // tb
    masked = Bp != B

    xp = jnp.pad(x2.astype(jnp.bfloat16), ((0, Bp - B), (0, 0)))
    tp = jnp.pad(target.astype(jnp.float32), ((0, Bp - B), (0, OP - D_OUT)))

    def const_spec(shape):
        # Constant index_map -> block is fetched once and stays VMEM-resident.
        return pl.BlockSpec(shape, lambda i: (0, 0))

    logits_p, loss = pl.pallas_call(
        functools.partial(mlp_kernel, batch=B, tile_b=tb, masked=masked),
        grid=(n_tiles,),
        out_shape=(jax.ShapeDtypeStruct((Bp, OP), jnp.float32),
                   jax.ShapeDtypeStruct((1, 1), jnp.float32)),
        in_specs=[
            pl.BlockSpec((tb, D_IN), lambda i: (i, 0)),   # x tile
            const_spec((D_IN, H1P)), const_spec((1, H1P)),
            const_spec((H1P, H2P)), const_spec((1, H2P)),
            const_spec((H2P, OP)), const_spec((1, OP)),
            pl.BlockSpec((tb, OP), lambda i: (i, 0)),     # target tile
        ],
        out_specs=(pl.BlockSpec((tb, OP), lambda i: (i, 0)),
                   pl.BlockSpec((1, 1), lambda i: (0, 0))),  # resident loss acc
        compiler_params=pltpu.CompilerParams(
            dimension_semantics=("arbitrary",)),  # loss accumulates over batch
    )(xp, w1p, b1p, w2p, b2p, w3p, b3p, tp)

    return logits_p[:B, :D_OUT], loss[0, 0]


def mlp_forward_ref(x, target, params):
    """Pure-JAX f32 reference for verification."""
    w1, b1, w2, b2, w3, b3 = params
    h = x.reshape(x.shape[0], -1).astype(jnp.float32)
    h = jnp.maximum(h @ w1 + b1, 0.0)
    h = jnp.maximum(h @ w2 + b2, 0.0)
    z = h @ w3 + b3
    loss = jnp.sqrt(jnp.sum((z - target) ** 2))
    return z, loss


if __name__ == "__main__":
    key = jax.random.PRNGKey(0)
    k_params, k_x, k_t = jax.random.split(key, 3)

    params = init_params(k_params)
    prepared = prepare_params(params)   # padded + bf16-cast once, outside jit

    B = 8
    x = jax.random.normal(k_x, (B, 1, 28, 28), jnp.float32)   # NCHW MNIST-like
    target = jax.random.normal(k_t, (B, 10), jnp.float32)

    fwd = jax.jit(mlp_forward)
    logits, loss = fwd(x, target, prepared)
    jax.block_until_ready((logits, loss))

    logits_ref, loss_ref = mlp_forward_ref(x, target, params)
    assert logits.shape == (B, 10) and loss.shape == ()
    assert jnp.allclose(logits, logits_ref, rtol=2e-2, atol=2e-2)
    assert jnp.allclose(loss, loss_ref, rtol=2e-2, atol=2e-2)

    print("KERNEL_OK")
</pallas_src>

<mosaic_0001>
module attributes {stable_mosaic.version = 11 : i64} {
  func.func @mlp_kernel(%arg0: i32, %arg1: memref<8x784xbf16, #tpu.memory_space<vmem>>, %arg2: memref<784x512xbf16, #tpu.memory_space<vmem>>, %arg3: memref<1x512xf32, #tpu.memory_space<vmem>>, %arg4: memref<512x256xbf16, #tpu.memory_space<vmem>>, %arg5: memref<1x256xf32, #tpu.memory_space<vmem>>, %arg6: memref<256x128xbf16, #tpu.memory_space<vmem>>, %arg7: memref<1x128xf32, #tpu.memory_space<vmem>>, %arg8: memref<8x128xf32, #tpu.memory_space<vmem>>, %arg9: memref<8x128xf32, #tpu.memory_space<vmem>>, %arg10: memref<1x1xf32, #tpu.memory_space<vmem>>) attributes {dimension_semantics = [#tpu.dimension_semantics<arbitrary>], iteration_bounds = array<i64: 1>, scalar_prefetch = 0 : i64, scratch_operands = 0 : i64, tpu.core_type = #tpu.core_type<tc>, window_params = [{transform_indices = @transform_0, window_bounds = array<i64: 8, 784>}, {pipeline_mode = #tpu.pipeline_mode<synchronous>, transform_indices = @transform_1, window_bounds = array<i64: 784, 512>}, {pipeline_mode = #tpu.pipeline_mode<synchronous>, transform_indices = @transform_2, window_bounds = array<i64: 1, 512>}, {pipeline_mode = #tpu.pipeline_mode<synchronous>, transform_indices = @transform_3, window_bounds = array<i64: 512, 256>}, {pipeline_mode = #tpu.pipeline_mode<synchronous>, transform_indices = @transform_4, window_bounds = array<i64: 1, 256>}, {pipeline_mode = #tpu.pipeline_mode<synchronous>, transform_indices = @transform_5, window_bounds = array<i64: 256, 128>}, {pipeline_mode = #tpu.pipeline_mode<synchronous>, transform_indices = @transform_6, window_bounds = array<i64: 1, 128>}, {transform_indices = @transform_7, window_bounds = array<i64: 8, 128>}, {transform_indices = @transform_8, window_bounds = array<i64: 8, 128>}, {pipeline_mode = #tpu.pipeline_mode<synchronous>, transform_indices = @transform_9, window_bounds = array<i64: 1, 1>}]} {
    %c0 = arith.constant 0 : index
    %c0_0 = arith.constant 0 : index
    %0 = vector.load %arg1[%c0, %c0_0] : memref<8x784xbf16, #tpu.memory_space<vmem>>, vector<8x784xbf16>
    %c0_1 = arith.constant 0 : index
    %c0_2 = arith.constant 0 : index
    %1 = vector.load %arg2[%c0_1, %c0_2] : memref<784x512xbf16, #tpu.memory_space<vmem>>, vector<784x512xbf16>
    %cst = arith.constant dense<0.000000e+00> : vector<8x512xf32>
    %2 = tpu.matmul %0, %1, %cst {dimension_numbers = #tpu.dot_dimension_numbers<[1], [0], [0], [1], [0, 0, 1, 1], [], []>} : vector<8x784xbf16>, vector<784x512xbf16>, vector<8x512xf32> -> vector<8x512xf32>
    %c0_3 = arith.constant 0 : index
    %c0_4 = arith.constant 0 : index
    %3 = vector.load %arg3[%c0_3, %c0_4] : memref<1x512xf32, #tpu.memory_space<vmem>>, vector<1x512xf32>
    %4 = vector.broadcast %3 : vector<1x512xf32> to vector<8x512xf32>
    %5 = arith.addf %2, %4 : vector<8x512xf32>
    %cst_5 = arith.constant 0.000000e+00 : f32
    %6 = vector.broadcast %cst_5 : f32 to vector<8x512xf32>
    %7 = arith.maximumf %5, %6 : vector<8x512xf32>
    %8 = arith.truncf %7 : vector<8x512xf32> to vector<8x512xbf16>
    %c0_6 = arith.constant 0 : index
    %c0_7 = arith.constant 0 : index
    %9 = vector.load %arg4[%c0_6, %c0_7] : memref<512x256xbf16, #tpu.memory_space<vmem>>, vector<512x256xbf16>
    %cst_8 = arith.constant dense<0.000000e+00> : vector<8x256xf32>
    %10 = tpu.matmul %8, %9, %cst_8 {dimension_numbers = #tpu.dot_dimension_numbers<[1], [0], [0], [1], [0, 0, 1, 1], [], []>} : vector<8x512xbf16>, vector<512x256xbf16>, vector<8x256xf32> -> vector<8x256xf32>
    %c0_9 = arith.constant 0 : index
    %c0_10 = arith.constant 0 : index
    %11 = vector.load %arg5[%c0_9, %c0_10] : memref<1x256xf32, #tpu.memory_space<vmem>>, vector<1x256xf32>
    %12 = vector.broadcast %11 : vector<1x256xf32> to vector<8x256xf32>
    %13 = arith.addf %10, %12 : vector<8x256xf32>
    %cst_11 = arith.constant 0.000000e+00 : f32
    %14 = vector.broadcast %cst_11 : f32 to vector<8x256xf32>
    %15 = arith.maximumf %13, %14 : vector<8x256xf32>
    %16 = arith.truncf %15 : vector<8x256xf32> to vector<8x256xbf16>
    %c0_12 = arith.constant 0 : index
    %c0_13 = arith.constant 0 : index
    %17 = vector.load %arg6[%c0_12, %c0_13] : memref<256x128xbf16, #tpu.memory_space<vmem>>, vector<256x128xbf16>
    %cst_14 = arith.constant dense<0.000000e+00> : vector<8x128xf32>
    %18 = tpu.matmul %16, %17, %cst_14 {dimension_numbers = #tpu.dot_dimension_numbers<[1], [0], [0], [1], [0, 0, 1, 1], [], []>} : vector<8x256xbf16>, vector<256x128xbf16>, vector<8x128xf32> -> vector<8x128xf32>
    %c0_15 = arith.constant 0 : index
    %c0_16 = arith.constant 0 : index
    %19 = vector.load %arg7[%c0_15, %c0_16] : memref<1x128xf32, #tpu.memory_space<vmem>>, vector<1x128xf32>
    %20 = vector.broadcast %19 : vector<1x128xf32> to vector<8x128xf32>
    %21 = arith.addf %18, %20 : vector<8x128xf32>
    %c0_17 = arith.constant 0 : index
    %c0_18 = arith.constant 0 : index
    %22 = vector.load %arg9[%c0_17, %c0_18] : memref<8x128xf32, #tpu.memory_space<vmem>>, vector<8x128xf32>
    tpu.vector_store %arg9[%c0_17, %c0_18], %21 {strides = array<i32>} : memref<8x128xf32, #tpu.memory_space<vmem>>, vector<8x128xf32>,
    %c0_19 = arith.constant 0 : index
    %c0_20 = arith.constant 0 : index
    %23 = vector.load %arg8[%c0_19, %c0_20] : memref<8x128xf32, #tpu.memory_space<vmem>>, vector<8x128xf32>
    %24 = arith.subf %21, %23 : vector<8x128xf32>
    %c0_i32 = arith.constant 0 : i32
    %25 = arith.cmpi eq, %arg0, %c0_i32 : i32
    %26 = arith.extui %25 : i1 to i32
    %c0_i32_21 = arith.constant 0 : i32
    %27 = arith.cmpi ne, %26, %c0_i32_21 : i32
    scf.if %27 {
      %cst_29 = arith.constant 0.000000e+00 : f32
      %40 = vector.broadcast %cst_29 : f32 to vector<1x1xf32>
      %c0_30 = arith.constant 0 : index
      %c0_31 = arith.constant 0 : index
      %41 = vector.load %arg10[%c0_30, %c0_31] : memref<1x1xf32, #tpu.memory_space<vmem>>, vector<1x1xf32>
      tpu.vector_store %arg10[%c0_30, %c0_31], %40 {strides = array<i32>} : memref<1x1xf32, #tpu.memory_space<vmem>>, vector<1x1xf32>,
    } else {
    }
    %c0_22 = arith.constant 0 : index
    %c0_23 = arith.constant 0 : index
    %28 = vector.load %arg10[%c0_22, %c0_23] : memref<1x1xf32, #tpu.memory_space<vmem>>, vector<1x1xf32>
    %29 = arith.mulf %24, %24 : vector<8x128xf32>
    %30 = vector.shape_cast %29 : vector<8x128xf32> to vector<1x8x128xf32>
    %cst_24 = arith.constant dense<0.000000e+00> : vector<1xf32>
    %31 = vector.multi_reduction <add>, %30, %cst_24 [1, 2] : vector<1x8x128xf32> to vector<1xf32>
    %32 = vector.shape_cast %31 : vector<1xf32> to vector<1x1x1xf32>
    %33 = vector.extract %32[0, 0, 0] : f32 from vector<1x1x1xf32>
    %34 = vector.broadcast %33 : f32 to vector<1x1xf32>
    %35 = arith.addf %28, %34 : vector<1x1xf32>
    %c0_25 = arith.constant 0 : index
    %c0_26 = arith.constant 0 : index
    %36 = vector.load %arg10[%c0_25, %c0_26] : memref<1x1xf32, #tpu.memory_space<vmem>>, vector<1x1xf32>
    tpu.vector_store %arg10[%c0_25, %c0_26], %35 {strides = array<i32>} : memref<1x1xf32, #tpu.memory_space<vmem>>, vector<1x1xf32>,
    %c0_i32_27 = arith.constant 0 : i32
    %37 = arith.cmpi eq, %arg0, %c0_i32_27 : i32
    %38 = arith.extui %37 : i1 to i32
    %c0_i32_28 = arith.constant 0 : i32
    %39 = arith.cmpi ne, %38, %c0_i32_28 : i32
    scf.if %39 {
      %c0_29 = arith.constant 0 : index
      %c0_30 = arith.constant 0 : index
      %40 = vector.load %arg10[%c0_29, %c0_30] : memref<1x1xf32, #tpu.memory_space<vmem>>, vector<1x1xf32>
      %41 = math.sqrt %40 : vector<1x1xf32>
      %c0_31 = arith.constant 0 : index
      %c0_32 = arith.constant 0 : index
      %42 = vector.load %arg10[%c0_31, %c0_32] : memref<1x1xf32, #tpu.memory_space<vmem>>, vector<1x1xf32>
      tpu.vector_store %arg10[%c0_31, %c0_32], %41 {strides = array<i32>} : memref<1x1xf32, #tpu.memory_space<vmem>>, vector<1x1xf32>,
    } else {
    }
    return
  }
  func.func @transform_0(%arg0: i32) -> (i32, i32) {
    %c0_i32 = arith.constant 0 : i32
    %c0_i32_0 = arith.constant 0 : i32
    return %arg0, %c0_i32 : i32, i32
  }
  func.func @transform_1(%arg0: i32) -> (i32, i32) {
    %c0_i32 = arith.constant 0 : i32
    %c0_i32_0 = arith.constant 0 : i32
    %c0_i32_1 = arith.constant 0 : i32
    return %c0_i32, %c0_i32_0 : i32, i32
  }
  func.func @transform_2(%arg0: i32) -> (i32, i32) {
    %c0_i32 = arith.constant 0 : i32
    %c0_i32_0 = arith.constant 0 : i32
    %c0_i32_1 = arith.constant 0 : i32
    return %c0_i32, %c0_i32_0 : i32, i32
  }
  func.func @transform_3(%arg0: i32) -> (i32, i32) {
    %c0_i32 = arith.constant 0 : i32
    %c0_i32_0 = arith.constant 0 : i32
    %c0_i32_1 = arith.constant 0 : i32
    return %c0_i32, %c0_i32_0 : i32, i32
  }
  func.func @transform_4(%arg0: i32) -> (i32, i32) {
    %c0_i32 = arith.constant 0 : i32
    %c0_i32_0 = arith.constant 0 : i32
    %c0_i32_1 = arith.constant 0 : i32
    return %c0_i32, %c0_i32_0 : i32, i32
  }
  func.func @transform_5(%arg0: i32) -> (i32, i32) {
    %c0_i32 = arith.constant 0 : i32
    %c0_i32_0 = arith.constant 0 : i32
    %c0_i32_1 = arith.constant 0 : i32
    return %c0_i32, %c0_i32_0 : i32, i32
  }
  func.func @transform_6(%arg0: i32) -> (i32, i32) {
    %c0_i32 = arith.constant 0 : i32
    %c0_i32_0 = arith.constant 0 : i32
    %c0_i32_1 = arith.constant 0 : i32
    return %c0_i32, %c0_i32_0 : i32, i32
  }
  func.func @transform_7(%arg0: i32) -> (i32, i32) {
    %c0_i32 = arith.constant 0 : i32
    %c0_i32_0 = arith.constant 0 : i32
    return %arg0, %c0_i32 : i32, i32
  }
  func.func @transform_8(%arg0: i32) -> (i32, i32) {
    %c0_i32 = arith.constant 0 : i32
    %c0_i32_0 = arith.constant 0 : i32
    return %arg0, %c0_i32 : i32, i32
  }
  func.func @transform_9(%arg0: i32) -> (i32, i32) {
    %c0_i32 = arith.constant 0 : i32
    %c0_i32_0 = arith.constant 0 : i32
    %c0_i32_1 = arith.constant 0 : i32
    return %c0_i32, %c0_i32_0 : i32, i32
  }
}

</mosaic_0001>

<llo_original>
// kernel: mlp_forward.1
$region0: #{mlp_forward.1}
  #allocation0 [shape = 'u32[]', space=smem, size = 0x4, offset = 0x4, fixed_abs, tag = 'smem constant byte address 0x4 - core index']
  #allocation1 [shape = 'u32[144,128]{1,0:T(1,128)}', space=vmem, size = 0x12000, scoped, tag = 'internal scratch']
  %s0 = inlined_call_operand.vmem [shape: bf16[8,784], index: 0, kind: input, shape index: {}]
  %s1 = inlined_call_operand.hbm [shape: bf16[784,512], index: 1, kind: input, shape index: {}]
  %s2 = inlined_call_operand.vmem [shape: f32[1,512], index: 2, kind: input, shape index: {}]
  %s3 = inlined_call_operand.vmem [shape: bf16[512,256], index: 3, kind: input, shape index: {}]
  %s4 = inlined_call_operand.vmem [shape: f32[1,256], index: 4, kind: input, shape index: {}]
  %s5 = inlined_call_operand.hbm [shape: bf16[256,128], index: 5, kind: input, shape index: {}]
  %s6 = inlined_call_operand.vmem [shape: f32[1,128], index: 6, kind: input, shape index: {}]
  %s7 = inlined_call_operand.vmem [shape: f32[8,128], index: 7, kind: input, shape index: {}]
  %s8 = inlined_call_operand.hbm [shape: f32[8,128], index: 8, kind: output, shape index: {0}]
  %s9 = inlined_call_operand.hbm [shape: f32[1,1], index: 9, kind: output, shape index: {1}]
  %10 = xla_tuple %s8, %s9
  %s11 = sld [smem:[#allocation0]]
  $region66: #{mlp_forward.1} parent=0
    _
  %s13 = ssub.s32 1, %s11
  %s14 = scalar_select 0, %s13, %s11
  $region1: #{mlp_forward.1} parent=0
    #allocation2 [shape = 'u8[802816]{0}', space=vmem, size = 0xc4000, scoped, tag = 'input window, operand 1, single buffered']
    #allocation3 [shape = 's32[1]{0}', space=sflag, size = 0x4, scoped, tag = 'scoped memory for mlp_forward.1']
    #allocation4 [shape = 's32[1]{0}', space=sflag, size = 0x4, scoped, tag = 'scoped memory for mlp_forward.1']
    #allocation5 [shape = 'u8[65536]{0}', space=vmem, size = 0x10000, scoped, tag = 'input window, operand 5, single buffered']
    #allocation6 [shape = 's32[1]{0}', space=sflag, size = 0x4, scoped, tag = 'scoped memory for mlp_forward.1']
    #allocation7 [shape = 'u8[4096]{0}', space=vmem, size = 0x1000, scoped, tag = 'output window, operand 0, single buffered']
    #allocation8 [shape = 'u8[512]{0}', space=vmem, size = 0x400, scoped, tag = 'output window, operand 1, single buffered']
    #allocation9 [shape = 's32[1]{0}', space=sflag, size = 0x4, scoped, tag = 'scoped memory for mlp_forward.1']
    %15 = vsyncpa [#allocation3], 0
    %16 = vsyncpa [#allocation6], 0
    %17 = vsyncpa [#allocation4], 0
    %18 = vsyncpa [#allocation9], 0
    // Predicated region
    $region2: #{mlp_forward.1} parent=1 // pred_check
      _
    $region3: #{mlp_forward.1} parent=1 // pred_check_branch
      %20 = sbr.rel (0) target = $region5
    $region4: #{mlp_forward.1} parent=1 // pred_region
      _
    $region5: #{mlp_forward.1} parent=1 // pred_fallthru
      _
    // Predicated region
    $region6: #{mlp_forward.1} parent=1 // pred_check
      _
    $region7: #{mlp_forward.1} parent=1 // pred_check_branch
      %22 = sbr.rel (0) target = $region9
    $region8: #{mlp_forward.1} parent=1 // pred_region
      %s24 = ssub.s32 25088, 25088
      %25 = vsyncadd [#allocation3], %s24
      %s26 = sshll.u32 [#allocation2], 4
      %s27 = int_to_ptr.vmem [resolvable:$true] %s26
      %32 = dma.hbm_to_vmem [thread:$0]  %s1, 25088, %s27, [#allocation3], 256, 256, 16
    $region9: #{mlp_forward.1} parent=1 // pred_fallthru
      _
    // Predicated region
    $region10: #{mlp_forward.1} parent=1 // pred_check
      _
    $region11: #{mlp_forward.1} parent=1 // pred_check_branch
      %34 = sbr.rel (0) target = $region13
    $region12: #{mlp_forward.1} parent=1 // pred_region
      _
    $region13: #{mlp_forward.1} parent=1 // pred_fallthru
      _
    // Predicated region
    $region14: #{mlp_forward.1} parent=1 // pred_check
      _
    $region15: #{mlp_forward.1} parent=1 // pred_check_branch
      %36 = sbr.rel (0) target = $region17
    $region16: #{mlp_forward.1} parent=1 // pred_region
      _
    $region17: #{mlp_forward.1} parent=1 // pred_fallthru
      _
    // Predicated region
    $region18: #{mlp_forward.1} parent=1 // pred_check
      _
    $region19: #{mlp_forward.1} parent=1 // pred_check_branch
      %38 = sbr.rel (0) target = $region21
    $region20: #{mlp_forward.1} parent=1 // pred_region
      _
    $region21: #{mlp_forward.1} parent=1 // pred_fallthru
      _
    // Predicated region
    $region22: #{mlp_forward.1} parent=1 // pred_check
      _
    $region23: #{mlp_forward.1} parent=1 // pred_check_branch
      %40 = sbr.rel (0) target = $region25
    $region24: #{mlp_forward.1} parent=1 // pred_region
      %s42 = ssub.s32 2048, 2048
      %43 = vsyncadd [#allocation6], %s42
      %s44 = sshll.u32 [#allocation5], 4
      %s45 = int_to_ptr.vmem [resolvable:$true] %s44
      %50 = dma.hbm_to_vmem [thread:$0]  %s5, 2048, %s45, [#allocation6], 64, 64, 4
    $region25: #{mlp_forward.1} parent=1 // pred_fallthru
      _
    // Predicated region
    $region26: #{mlp_forward.1} parent=1 // pred_check
      _
    $region27: #{mlp_forward.1} parent=1 // pred_check_branch
      %52 = sbr.rel (0) target = $region29
    $region28: #{mlp_forward.1} parent=1 // pred_region
      _
    $region29: #{mlp_forward.1} parent=1 // pred_fallthru
      _
    // Predicated region
    $region30: #{mlp_forward.1} parent=1 // pred_check
      _
    $region31: #{mlp_forward.1} parent=1 // pred_check_branch
      %54 = sbr.rel (0) target = $region33
    $region32: #{mlp_forward.1} parent=1 // pred_region
      _
    $region33: #{mlp_forward.1} parent=1 // pred_fallthru
      _
    // Predicated region
    $region34: #{mlp_forward.1} parent=1 // pred_check
      _
    $region35: #{mlp_forward.1} parent=1 // pred_check_branch
      %56 = sbr.rel (0) target = $region37
    $region36: #{mlp_forward.1} parent=1 // pred_region
      %57 = dma.done [#allocation3], 25088
    $region37: #{mlp_forward.1} parent=1 // pred_fallthru
      _
    // Predicated region
    $region38: #{mlp_forward.1} parent=1 // pred_check
      _
    $region39: #{mlp_forward.1} parent=1 // pred_check_branch
      %59 = sbr.rel (0) target = $region41
    $region40: #{mlp_forward.1} parent=1 // pred_region
      %60 = dma.done [#allocation6], 2048
    $region41: #{mlp_forward.1} parent=1 // pred_fallthru
      _
    %v62 = vld [vmem:[%s0] sm:$0xff]
    %v63 = vld [vmem:[%s0 + $0x8] sm:$0xff]
    %v64 = vld [vmem:[%s0 + $0x10] sm:$0xff]
    %v65 = vld [vmem:[%s0 + $0x18] sm:$0xf]
    %v66 = vld [vmem:[#allocation2] sm:$0xff]
    %v67 = vld [vmem:[#allocation2 + $0x8] sm:$0xff]
    %v68 = vld [vmem:[#allocation2 + $0x10] sm:$0xff]
    %v69 = vld [vmem:[#allocation2 + $0x18] sm:$0xff]
    %v70 = vld [vmem:[#allocation2 + $0x20] sm:$0xff]
    %v71 = vld [vmem:[#allocation2 + $0x28] sm:$0xff]
    %v72 = vld [vmem:[#allocation2 + $0x30] sm:$0xff]
    %v73 = vld [vmem:[#allocation2 + $0x38] sm:$0xff]
    %v74 = vld [vmem:[#allocation2 + $0x40] sm:$0xff]
    %v75 = vld [vmem:[#allocation2 + $0x48] sm:$0xff]
    %v76 = vld [vmem:[#allocation2 + $0x50] sm:$0xff]
    %v77 = vld [vmem:[#allocation2 + $0x58] sm:$0xff]
    %v78 = vld [vmem:[#allocation2 + $0x60] sm:$0xff]
    %v79 = vld [vmem:[#allocation2 + $0x68] sm:$0xff]
    %v80 = vld [vmem:[#allocation2 + $0x70] sm:$0xff]
    %v81 = vld [vmem:[#allocation2 + $0x78] sm:$0xff]
    %v82 = vld [vmem:[#allocation2 + $0x80] sm:$0xff]
    %v83 = vld [vmem:[#allocation2 + $0x88] sm:$0xff]
    %v84 = vld [vmem:[#allocation2 + $0x90] sm:$0xff]
    %v85 = vld [vmem:[#allocation2 + $0x98] sm:$0xff]
    %v86 = vld [vmem:[#allocation2 + $0xa0] sm:$0xff]
    %v87 = vld [vmem:[#allocation2 + $0xa8] sm:$0xff]
    %v88 = vld [vmem:[#allocation2 + $0xb0] sm:$0xff]
    %v89 = vld [vmem:[#allocation2 + $0xb8] sm:$0xff]
    %v90 = vld [vmem:[#allocation2 + $0xc0] sm:$0xff]
    %v91 = vld [vmem:[#allocation2 + $0xc8] sm:$0xff]
    %v92 = vld [vmem:[#allocation2 + $0xd0] sm:$0xff]
    %v93 = vld [vmem:[#allocation2 + $0xd8] sm:$0xff]
    %v94 = vld [vmem:[#allocation2 + $0xe0] sm:$0xff]
    %v95 = vld [vmem:[#allocation2 + $0xe8] sm:$0xff]
    %v96 = vld [vmem:[#allocation2 + $0xf0] sm:$0xff]
    %v97 = vld [vmem:[#allocation2 + $0xf8] sm:$0xff]
    %v98 = vld [vmem:[#allocation2 + $0x100] sm:$0xff]
    %v99 = vld [vmem:[#allocation2 + $0x108] sm:$0xff]
    %v100 = vld [vmem:[#allocation2 + $0x110] sm:$0xff]
    %v101 = vld [vmem:[#allocation2 + $0x118] sm:$0xff]
    %v102 = vld [vmem:[#allocation2 + $0x120] sm:$0xff]
    %v103 = vld [vmem:[#allocation2 + $0x128] sm:$0xff]
    %v104 = vld [vmem:[#allocation2 + $0x130] sm:$0xff]
    %v105 = vld [vmem:[#allocation2 + $0x138] sm:$0xff]
    %v106 = vld [vmem:[#allocation2 + $0x140] sm:$0xff]
    %v107 = vld [vmem:[#allocation2 + $0x148] sm:$0xff]
    %v108 = vld [vmem:[#allocation2 + $0x150] sm:$0xff]
    %v109 = vld [vmem:[#allocation2 + $0x158] sm:$0xff]
    %v110 = vld [vmem:[#allocation2 + $0x160] sm:$0xff]
    %v111 = vld [vmem:[#allocation2 + $0x168] sm:$0xff]
    %v112 = vld [vmem:[#allocation2 + $0x170] sm:$0xff]
    %v113 = vld [vmem:[#allocation2 + $0x178] sm:$0xff]
    %v114 = vld [vmem:[#allocation2 + $0x180] sm:$0xff]
    %v115 = vld [vmem:[#allocation2 + $0x188] sm:$0xff]
    %v116 = vld [vmem:[#allocation2 + $0x190] sm:$0xff]
    %v117 = vld [vmem:[#allocation2 + $0x198] sm:$0xff]
    %v118 = vld [vmem:[#allocation2 + $0x1a0] sm:$0xff]
    %v119 = vld [vmem:[#allocation2 + $0x1a8] sm:$0xff]
    %v120 = vld [vmem:[#allocation2 + $0x1b0] sm:$0xff]
    %v121 = vld [vmem:[#allocation2 + $0x1b8] sm:$0xff]
    %v122 = vld [vmem:[#allocation2 + $0x1c0] sm:$0xff]
    %v123 = vld [vmem:[#allocation2 + $0x1c8] sm:$0xff]
    %v124 = vld [vmem:[#allocation2 + $0x1d0] sm:$0xff]
    %v125 = vld [vmem:[#allocation2 + $0x1d8] sm:$0xff]
    %v126 = vld [vmem:[#allocation2 + $0x1e0] sm:$0xff]
    %v127 = vld [vmem:[#allocation2 + $0x1e8] sm:$0xff]
    %v128 = vld [vmem:[#allocation2 + $0x1f0] sm:$0xff]
    %v129 = vld [vmem:[#allocation2 + $0x1f8] sm:$0xff]
    %v130 = vld [vmem:[#allocation2 + $0x200] sm:$0xff]
    %v131 = vld [vmem:[#allocation2 + $0x208] sm:$0xff]
    %v132 = vld [vmem:[#allocation2 + $0x210] sm:$0xff]
    %v133 = vld [vmem:[#allocation2 + $0x218] sm:$0xff]
    %v134 = vld [vmem:[#allocation2 + $0x220] sm:$0xff]
    %v135 = vld [vmem:[#allocation2 + $0x228] sm:$0xff]
    %v136 = vld [vmem:[#allocation2 + $0x230] sm:$0xff]
    %v137 = vld [vmem:[#allocation2 + $0x238] sm:$0xff]
    %v138 = vld [vmem:[#allocation2 + $0x240] sm:$0xff]
    %v139 = vld [vmem:[#allocation2 + $0x248] sm:$0xff]
    %v140 = vld [vmem:[#allocation2 + $0x250] sm:$0xff]
    %v141 = vld [vmem:[#allocation2 + $0x258] sm:$0xff]
    %v142 = vld [vmem:[#allocation2 + $0x260] sm:$0xff]
    %v143 = vld [vmem:[#allocation2 + $0x268] sm:$0xff]
    %v144 = vld [vmem:[#allocation2 + $0x270] sm:$0xff]
    %v145 = vld [vmem:[#allocation2 + $0x278] sm:$0xff]
    %v146 = vld [vmem:[#allocation2 + $0x280] sm:$0xff]
    %v147 = vld [vmem:[#allocation2 + $0x288] sm:$0xff]
    %v148 = vld [vmem:[#allocation2 + $0x290] sm:$0xff]
    %v149 = vld [vmem:[#allocation2 + $0x298] sm:$0xff]
    %v150 = vld [vmem:[#allocation2 + $0x2a0] sm:$0xff]
    %v151 = vld [vmem:[#allocation2 + $0x2a8] sm:$0xff]
    %v152 = vld [vmem:[#allocation2 + $0x2b0] sm:$0xff]
    %v153 = vld [vmem:[#allocation2 + $0x2b8] sm:$0xff]
    %v154 = vld [vmem:[#allocation2 + $0x2c0] sm:$0xff]
    %v155 = vld [vmem:[#allocation2 + $0x2c8] sm:$0xff]
    %v156 = vld [vmem:[#allocation2 + $0x2d0] sm:$0xff]
    %v157 = vld [vmem:[#allocation2 + $0x2d8] sm:$0xff]
    %v158 = vld [vmem:[#allocation2 + $0x2e0] sm:$0xff]
    %v159 = vld [vmem:[#allocation2 + $0x2e8] sm:$0xff]
    %v160 = vld [vmem:[#allocation2 + $0x2f0] sm:$0xff]
    %v161 = vld [vmem:[#allocation2 + $0x2f8] sm:$0xff]
    %v162 = vld [vmem:[#allocation2 + $0x300] sm:$0xff]
    %v163 = vld [vmem:[#allocation2 + $0x308] sm:$0xff]
    %v164 = vld [vmem:[#allocation2 + $0x310] sm:$0xff]
    %v165 = vld [vmem:[#allocation2 + $0x318] sm:$0xff]
    %v166 = vld [vmem:[#allocation2 + $0x320] sm:$0xff]
    %v167 = vld [vmem:[#allocation2 + $0x328] sm:$0xff]
    %v168 = vld [vmem:[#allocation2 + $0x330] sm:$0xff]
    %v169 = vld [vmem:[#allocation2 + $0x338] sm:$0xff]
    %v170 = vld [vmem:[#allocation2 + $0x340] sm:$0xff]
    %v171 = vld [vmem:[#allocation2 + $0x348] sm:$0xff]
    %v172 = vld [vmem:[#allocation2 + $0x350] sm:$0xff]
    %v173 = vld [vmem:[#allocation2 + $0x358] sm:$0xff]
    %v174 = vld [vmem:[#allocation2 + $0x360] sm:$0xff]
    %v175 = vld [vmem:[#allocation2 + $0x368] sm:$0xff]
    %v176 = vld [vmem:[#allocation2 + $0x370] sm:$0xff]
    %v177 = vld [vmem:[#allocation2 + $0x378] sm:$0xff]
    %v178 = vld [vmem:[#allocation2 + $0x380] sm:$0xff]
    %v179 = vld [vmem:[#allocation2 + $0x388] sm:$0xff]
    %v180 = vld [vmem:[#allocation2 + $0x390] sm:$0xff]
    %v181 = vld [vmem:[#allocation2 + $0x398] sm:$0xff]
    %v182 = vld [vmem:[#allocation2 + $0x3a0] sm:$0xff]
    %v183 = vld [vmem:[#allocation2 + $0x3a8] sm:$0xff]
    %v184 = vld [vmem:[#allocation2 + $0x3b0] sm:$0xff]
    %v185 = vld [vmem:[#allocation2 + $0x3b8] sm:$0xff]
    %v186 = vld [vmem:[#allocation2 + $0x3c0] sm:$0xff]
    %v187 = vld [vmem:[#allocation2 + $0x3c8] sm:$0xff]
    %v188 = vld [vmem:[#allocation2 + $0x3d0] sm:$0xff]
    %v189 = vld [vmem:[#allocation2 + $0x3d8] sm:$0xff]
    %v190 = vld [vmem:[#allocation2 + $0x3e0] sm:$0xff]
    %v191 = vld [vmem:[#allocation2 + $0x3e8] sm:$0xff]
    %v192 = vld [vmem:[#allocation2 + $0x3f0] sm:$0xff]
    %v193 = vld [vmem:[#allocation2 + $0x3f8] sm:$0xff]
    %v194 = vld [vmem:[#allocation2 + $0x400] sm:$0xff]
    %v195 = vld [vmem:[#allocation2 + $0x408] sm:$0xff]
    %v196 = vld [vmem:[#allocation2 + $0x410] sm:$0xff]
    %v197 = vld [vmem:[#allocation2 + $0x418] sm:$0xff]
    %v198 = vld [vmem:[#allocation2 + $0x420] sm:$0xff]
    %v199 = vld [vmem:[#allocation2 + $0x428] sm:$0xff]
    %v200 = vld [vmem:[#allocation2 + $0x430] sm:$0xff]
    %v201 = vld [vmem:[#allocation2 + $0x438] sm:$0xff]
    %v202 = vld [vmem:[#allocation2 + $0x440] sm:$0xff]
    %v203 = vld [vmem:[#allocation2 + $0x448] sm:$0xff]
    %v204 = vld [vmem:[#allocation2 + $0x450] sm:$0xff]
    %v205 = vld [vmem:[#allocation2 + $0x458] sm:$0xff]
    %v206 = vld [vmem:[#allocation2 + $0x460] sm:$0xff]
    %v207 = vld [vmem:[#allocation2 + $0x468] sm:$0xff]
    %v208 = vld [vmem:[#allocation2 + $0x470] sm:$0xff]
    %v209 = vld [vmem:[#allocation2 + $0x478] sm:$0xff]
    %v210 = vld [vmem:[#allocation2 + $0x480] sm:$0xff]
    %v211 = vld [vmem:[#allocation2 + $0x488] sm:$0xff]
    %v212 = vld [vmem:[#allocation2 + $0x490] sm:$0xff]
    %v213 = vld [vmem:[#allocation2 + $0x498] sm:$0xff]
    %v214 = vld [vmem:[#allocation2 + $0x4a0] sm:$0xff]
    %v215 = vld [vmem:[#allocation2 + $0x4a8] sm:$0xff]
    %v216 = vld [vmem:[#allocation2 + $0x4b0] sm:$0xff]
    %v217 = vld [vmem:[#allocation2 + $0x4b8] sm:$0xff]
    %v218 = vld [vmem:[#allocation2 + $0x4c0] sm:$0xff]
    %v219 = vld [vmem:[#allocation2 + $0x4c8] sm:$0xff]
    %v220 = vld [vmem:[#allocation2 + $0x4d0] sm:$0xff]
    %v221 = vld [vmem:[#allocation2 + $0x4d8] sm:$0xff]
    %v222 = vld [vmem:[#allocation2 + $0x4e0] sm:$0xff]
    %v223 = vld [vmem:[#allocation2 + $0x4e8] sm:$0xff]
    %v224 = vld [vmem:[#allocation2 + $0x4f0] sm:$0xff]
    %v225 = vld [vmem:[#allocation2 + $0x4f8] sm:$0xff]
    %v226 = vld [vmem:[#allocation2 + $0x500] sm:$0xff]
    %v227 = vld [vmem:[#allocation2 + $0x508] sm:$0xff]
    %v228 = vld [vmem:[#allocation2 + $0x510] sm:$0xff]
    %v229 = vld [vmem:[#allocation2 + $0x518] sm:$0xff]
    %v230 = vld [vmem:[#allocation2 + $0x520] sm:$0xff]
    %v231 = vld [vmem:[#allocation2 + $0x528] sm:$0xff]
    %v232 = vld [vmem:[#allocation2 + $0x530] sm:$0xff]
    %v233 = vld [vmem:[#allocation2 + $0x538] sm:$0xff]
    %v234 = vld [vmem:[#allocation2 + $0x540] sm:$0xff]
    %v235 = vld [vmem:[#allocation2 + $0x548] sm:$0xff]
    %v236 = vld [vmem:[#allocation2 + $0x550] sm:$0xff]
    %v237 = vld [vmem:[#allocation2 + $0x558] sm:$0xff]
    %v238 = vld [vmem:[#allocation2 + $0x560] sm:$0xff]
    %v239 = vld [vmem:[#allocation2 + $0x568] sm:$0xff]
    %v240 = vld [vmem:[#allocation2 + $0x570] sm:$0xff]
    %v241 = vld [vmem:[#allocation2 + $0x578] sm:$0xff]
    %v242 = vld [vmem:[#allocation2 + $0x580] sm:$0xff]
    %v243 = vld [vmem:[#allocation2 + $0x588] sm:$0xff]
    %v244 = vld [vmem:[#allocation2 + $0x590] sm:$0xff]
    %v245 = vld [vmem:[#allocation2 + $0x598] sm:$0xff]
    %v246 = vld [vmem:[#allocation2 + $0x5a0] sm:$0xff]
    %v247 = vld [vmem:[#allocation2 + $0x5a8] sm:$0xff]
    %v248 = vld [vmem:[#allocation2 + $0x5b0] sm:$0xff]
    %v249 = vld [vmem:[#allocation2 + $0x5b8] sm:$0xff]
    %v250 = vld [vmem:[#allocation2 + $0x5c0] sm:$0xff]
    %v251 = vld [vmem:[#allocation2 + $0x5c8] sm:$0xff]
    %v252 = vld [vmem:[#allocation2 + $0x5d0] sm:$0xff]
    %v253 = vld [vmem:[#allocation2 + $0x5d8] sm:$0xff]
    %v254 = vld [vmem:[#allocation2 + $0x5e0] sm:$0xff]
    %v255 = vld [vmem:[#allocation2 + $0x5e8] sm:$0xff]
    %v256 = vld [vmem:[#allocation2 + $0x5f0] sm:$0xff]
    %v257 = vld [vmem:[#allocation2 + $0x5f8] sm:$0xff]
    %v258 = vld [vmem:[#allocation2 + $0x600] sm:$0xff]
    %v259 = vld [vmem:[#allocation2 + $0x608] sm:$0xff]
    %v260 = vld [vmem:[#allocation2 + $0x610] sm:$0xff]
    %v261 = vld [vmem:[#allocation2 + $0x618] sm:$0xff]
    %v262 = vld [vmem:[%s2] sm:$0xf]
    %v264 = vlaneseq
    %v265 = vshrl.u32 %v264, 7
    %v266 = vsub.s32 0, %v265
    %v267 = vrot.slane %v262, %v266
    %v268 = vlaneseq
    %v269 = vshrl.u32 %v268, 7
    %v270 = vsub.s32 1, %v269
    %v271 = vrot.slane %v262, %v270
    %v272 = vlaneseq
    %v273 = vshrl.u32 %v272, 7
    %v274 = vsub.s32 2, %v273
    %v275 = vrot.slane %v262, %v274
    %v276 = vlaneseq
    %v277 = vshrl.u32 %v276, 7
    %v278 = vsub.s32 3, %v277
    %v279 = vrot.slane %v262, %v278
    %v288 = vunpack.c.l.b16 %v62
    %v289 = vunpack.c.h.b16 %v62
    %v290 = vunpack.c.l.b16 %v63
    %v291 = vunpack.c.h.b16 %v63
    %v292 = vunpack.c.l.b16 %v64
    %v293 = vunpack.c.h.b16 %v64
    %v294 = vunpack.c.l.b16 %v65
    %v295 = vpack.c.b16 %v288, %v288
    %v296 = vpack.c.b16 %v289, %v289
    %v297 = vpack.c.b16 %v290, %v290
    %v298 = vpack.c.b16 %v291, %v291
    %v299 = vpack.c.b16 %v292, %v292
    %v300 = vpack.c.b16 %v293, %v293
    %v301 = vpack.c.b16 %v294, %v294
    %v504 = vunpack.c.l.b16 %v66
    %v505 = vunpack.c.h.b16 %v66
    %v506 = vunpack.c.l.b16 %v67
    %v507 = vunpack.c.h.b16 %v67
    %v508 = vunpack.c.l.b16 %v68
    %v509 = vunpack.c.h.b16 %v68
    %v510 = vunpack.c.l.b16 %v69
    %v511 = vunpack.c.h.b16 %v69
    %v512 = vunpack.c.l.b16 %v70
    %v513 = vunpack.c.h.b16 %v70
    %v514 = vunpack.c.l.b16 %v71
    %v515 = vunpack.c.h.b16 %v71
    %v516 = vunpack.c.l.b16 %v72
    %v517 = vunpack.c.h.b16 %v72
    %v518 = vunpack.c.l.b16 %v73
    %v519 = vunpack.c.h.b16 %v73
    %v520 = vunpack.c.l.b16 %v74
    %v521 = vunpack.c.h.b16 %v74
    %v522 = vunpack.c.l.b16 %v75
    %v523 = vunpack.c.h.b16 %v75
    %v524 = vunpack.c.l.b16 %v76
    %v525 = vunpack.c.h.b16 %v76
    %v526 = vunpack.c.l.b16 %v77
    %v527 = vunpack.c.h.b16 %v77
    %v528 = vunpack.c.l.b16 %v78
    %v529 = vunpack.c.h.b16 %v78
    %v530 = vunpack.c.l.b16 %v79
    %v531 = vunpack.c.h.b16 %v79
    %v532 = vunpack.c.l.b16 %v80
    %v533 = vunpack.c.h.b16 %v80
    %v534 = vunpack.c.l.b16 %v81
    %v535 = vunpack.c.h.b16 %v81
    %v536 = vunpack.c.l.b16 %v82
    %v537 = vunpack.c.h.b16 %v82
    %v538 = vunpack.c.l.b16 %v83
    %v539 = vunpack.c.h.b16 %v83
    %v540 = vunpack.c.l.b16 %v84
    %v541 = vunpack.c.h.b16 %v84
    %v542 = vunpack.c.l.b16 %v85
    %v543 = vunpack.c.h.b16 %v85
    %v544 = vunpack.c.l.b16 %v86
    %v545 = vunpack.c.h.b16 %v86
    %v546 = vunpack.c.l.b16 %v87
    %v547 = vunpack.c.h.b16 %v87
    %v548 = vunpack.c.l.b16 %v88
    %v549 = vunpack.c.h.b16 %v88
    %v550 = vunpack.c.l.b16 %v89
    %v551 = vunpack.c.h.b16 %v89
    %v552 = vunpack.c.l.b16 %v90
    %v553 = vunpack.c.h.b16 %v90
    %v554 = vunpack.c.l.b16 %v91
    %v555 = vunpack.c.h.b16 %v91
    %v556 = vunpack.c.l.b16 %v92
    %v557 = vunpack.c.h.b16 %v92
    %v558 = vunpack.c.l.b16 %v93
    %v559 = vunpack.c.h.b16 %v93
    %v560 = vunpack.c.l.b16 %v94
    %v561 = vunpack.c.h.b16 %v94
    %v562 = vunpack.c.l.b16 %v95
    %v563 = vunpack.c.h.b16 %v95
    %v564 = vunpack.c.l.b16 %v96
    %v565 = vunpack.c.h.b16 %v96
    %v566 = vunpack.c.l.b16 %v97
    %v567 = vunpack.c.h.b16 %v97
    %v568 = vunpack.c.l.b16 %v98
    %v569 = vunpack.c.h.b16 %v98
    %v570 = vunpack.c.l.b16 %v99
    %v571 = vunpack.c.h.b16 %v99
    %v572 = vunpack.c.l.b16 %v100
    %v573 = vunpack.c.h.b16 %v100
    %v574 = vunpack.c.l.b16 %v101
    %v575 = vunpack.c.h.b16 %v101
    %v576 = vunpack.c.l.b16 %v102
    %v577 = vunpack.c.h.b16 %v102
    %v578 = vunpack.c.l.b16 %v103
    %v579 = vunpack.c.h.b16 %v103
    %v580 = vunpack.c.l.b16 %v104
    %v581 = vunpack.c.h.b16 %v104
    %v582 = vunpack.c.l.b16 %v105
    %v583 = vunpack.c.h.b16 %v105
    %v584 = vunpack.c.l.b16 %v106
    %v585 = vunpack.c.h.b16 %v106
    %v586 = vunpack.c.l.b16 %v107
    %v587 = vunpack.c.h.b16 %v107
    %v588 = vunpack.c.l.b16 %v108
    %v589 = vunpack.c.h.b16 %v108
    %v590 = vunpack.c.l.b16 %v109
    %v591 = vunpack.c.h.b16 %v109
    %v592 = vunpack.c.l.b16 %v110
    %v593 = vunpack.c.h.b16 %v110
    %v594 = vunpack.c.l.b16 %v111
    %v595 = vunpack.c.h.b16 %v111
    %v596 = vunpack.c.l.b16 %v112
    %v597 = vunpack.c.h.b16 %v112
    %v598 = vunpack.c.l.b16 %v113
    %v599 = vunpack.c.h.b16 %v113
    %v600 = vunpack.c.l.b16 %v114
    %v601 = vunpack.c.h.b16 %v114
    %v602 = vunpack.c.l.b16 %v115
    %v603 = vunpack.c.h.b16 %v115
    %v604 = vunpack.c.l.b16 %v116
    %v605 = vunpack.c.h.b16 %v116
    %v606 = vunpack.c.l.b16 %v117
    %v607 = vunpack.c.h.b16 %v117
    %v608 = vunpack.c.l.b16 %v118
    %v609 = vunpack.c.h.b16 %v118
    %v610 = vunpack.c.l.b16 %v119
    %v611 = vunpack.c.h.b16 %v119
    %v612 = vunpack.c.l.b16 %v120
    %v613 = vunpack.c.h.b16 %v120
    %v614 = vunpack.c.l.b16 %v121
    %v615 = vunpack.c.h.b16 %v121
    %v616 = vunpack.c.l.b16 %v122
    %v617 = vunpack.c.h.b16 %v122
    %v618 = vunpack.c.l.b16 %v123
    %v619 = vunpack.c.h.b16 %v123
    %v620 = vunpack.c.l.b16 %v124
    %v621 = vunpack.c.h.b16 %v124
    %v622 = vunpack.c.l.b16 %v125
    %v623 = vunpack.c.h.b16 %v125
    %v624 = vunpack.c.l.b16 %v126
    %v625 = vunpack.c.h.b16 %v126
    %v626 = vunpack.c.l.b16 %v127
    %v627 = vunpack.c.h.b16 %v127
    %v628 = vunpack.c.l.b16 %v128
    %v629 = vunpack.c.h.b16 %v128
    %v630 = vunpack.c.l.b16 %v129
    %v631 = vunpack.c.h.b16 %v129
    %v632 = vunpack.c.l.b16 %v130
    %v633 = vunpack.c.h.b16 %v130
    %v634 = vunpack.c.l.b16 %v131
    %v635 = vunpack.c.h.b16 %v131
    %v636 = vunpack.c.l.b16 %v132
    %v637 = vunpack.c.h.b16 %v132
    %v638 = vunpack.c.l.b16 %v133
    %v639 = vunpack.c.h.b16 %v133
    %v640 = vunpack.c.l.b16 %v134
    %v641 = vunpack.c.h.b16 %v134
    %v642 = vunpack.c.l.b16 %v135
    %v643 = vunpack.c.h.b16 %v135
    %v644 = vunpack.c.l.b16 %v136
    %v645 = vunpack.c.h.b16 %v136
    %v646 = vunpack.c.l.b16 %v137
    %v647 = vunpack.c.h.b16 %v137
    %v648 = vunpack.c.l.b16 %v138
    %v649 = vunpack.c.h.b16 %v138
    %v650 = vunpack.c.l.b16 %v139
    %v651 = vunpack.c.h.b16 %v139
    %v652 = vunpack.c.l.b16 %v140
    %v653 = vunpack.c.h.b16 %v140
    %v654 = vunpack.c.l.b16 %v141
    %v655 = vunpack.c.h.b16 %v141
    %v656 = vunpack.c.l.b16 %v142
    %v657 = vunpack.c.h.b16 %v142
    %v658 = vunpack.c.l.b16 %v143
    %v659 = vunpack.c.h.b16 %v143
    %v660 = vunpack.c.l.b16 %v144
    %v661 = vunpack.c.h.b16 %v144
    %v662 = vunpack.c.l.b16 %v145
    %v663 = vunpack.c.h.b16 %v145
    %v664 = vunpack.c.l.b16 %v146
    %v665 = vunpack.c.h.b16 %v146
    %v666 = vunpack.c.l.b16 %v147
    %v667 = vunpack.c.h.b16 %v147
    %v668 = vunpack.c.l.b16 %v148
    %v669 = vunpack.c.h.b16 %v148
    %v670 = vunpack.c.l.b16 %v149
    %v671 = vunpack.c.h.b16 %v149
    %v672 = vunpack.c.l.b16 %v150
    %v673 = vunpack.c.h.b16 %v150
    %v674 = vunpack.c.l.b16 %v151
    %v675 = vunpack.c.h.b16 %v151
    %v676 = vunpack.c.l.b16 %v152
    %v677 = vunpack.c.h.b16 %v152
    %v678 = vunpack.c.l.b16 %v153
    %v679 = vunpack.c.h.b16 %v153
    %v680 = vunpack.c.l.b16 %v154
    %v681 = vunpack.c.h.b16 %v154
    %v682 = vunpack.c.l.b16 %v155
    %v683 = vunpack.c.h.b16 %v155
    %v684 = vunpack.c.l.b16 %v156
    %v685 = vunpack.c.h.b16 %v156
    %v686 = vunpack.c.l.b16 %v157
    %v687 = vunpack.c.h.b16 %v157
    %v688 = vunpack.c.l.b16 %v158
    %v689 = vunpack.c.h.b16 %v158
    %v690 = vunpack.c.l.b16 %v159
    %v691 = vunpack.c.h.b16 %v159
    %v692 = vunpack.c.l.b16 %v160
    %v693 = vunpack.c.h.b16 %v160
    %v694 = vunpack.c.l.b16 %v161
    %v695 = vunpack.c.h.b16 %v161
    %v696 = vunpack.c.l.b16 %v162
    %v697 = vunpack.c.h.b16 %v162
    %v698 = vunpack.c.l.b16 %v163
    %v699 = vunpack.c.h.b16 %v163
    %v700 = vunpack.c.l.b16 %v164
    %v701 = vunpack.c.h.b16 %v164
    %v702 = vunpack.c.l.b16 %v165
    %v703 = vunpack.c.h.b16 %v165
    %v704 = vunpack.c.l.b16 %v166
    %v705 = vunpack.c.h.b16 %v166
    %v706 = vunpack.c.l.b16 %v167
    %v707 = vunpack.c.h.b16 %v167
    %v708 = vunpack.c.l.b16 %v168
    %v709 = vunpack.c.h.b16 %v168
    %v710 = vunpack.c.l.b16 %v169
    %v711 = vunpack.c.h.b16 %v169
    %v712 = vunpack.c.l.b16 %v170
    %v713 = vunpack.c.h.b16 %v170
    %v714 = vunpack.c.l.b16 %v171
    %v715 = vunpack.c.h.b16 %v171
    %v716 = vunpack.c.l.b16 %v172
    %v717 = vunpack.c.h.b16 %v172
    %v718 = vunpack.c.l.b16 %v173
    %v719 = vunpack.c.h.b16 %v173
    %v720 = vunpack.c.l.b16 %v174
    %v721 = vunpack.c.h.b16 %v174
    %v722 = vunpack.c.l.b16 %v175
    %v723 = vunpack.c.h.b16 %v175
    %v724 = vunpack.c.l.b16 %v176
    %v725 = vunpack.c.h.b16 %v176
    %v726 = vunpack.c.l.b16 %v177
    %v727 = vunpack.c.h.b16 %v177
    %v728 = vunpack.c.l.b16 %v178
    %v729 = vunpack.c.h.b16 %v178
    %v730 = vunpack.c.l.b16 %v179
    %v731 = vunpack.c.h.b16 %v179
    %v732 = vunpack.c.l.b16 %v180
    %v733 = vunpack.c.h.b16 %v180
    %v734 = vunpack.c.l.b16 %v181
    %v735 = vunpack.c.h.b16 %v181
    %v736 = vunpack.c.l.b16 %v182
    %v737 = vunpack.c.h.b16 %v182
    %v738 = vunpack.c.l.b16 %v183
    %v739 = vunpack.c.h.b16 %v183
    %v740 = vunpack.c.l.b16 %v184
    %v741 = vunpack.c.h.b16 %v184
    %v742 = vunpack.c.l.b16 %v185
    %v743 = vunpack.c.h.b16 %v185
    %v744 = vunpack.c.l.b16 %v186
    %v745 = vunpack.c.h.b16 %v186
    %v746 = vunpack.c.l.b16 %v187
    %v747 = vunpack.c.h.b16 %v187
    %v748 = vunpack.c.l.b16 %v188
    %v749 = vunpack.c.h.b16 %v188
    %v750 = vunpack.c.l.b16 %v189
    %v751 = vunpack.c.h.b16 %v189
    %v752 = vunpack.c.l.b16 %v190
    %v753 = vunpack.c.h.b16 %v190
    %v754 = vunpack.c.l.b16 %v191
    %v755 = vunpack.c.h.b16 %v191
    %v756 = vunpack.c.l.b16 %v192
    %v757 = vunpack.c.h.b16 %v192
    %v758 = vunpack.c.l.b16 %v193
    %v759 = vunpack.c.h.b16 %v193
    %v760 = vunpack.c.l.b16 %v194
    %v761 = vunpack.c.h.b16 %v194
    %v762 = vunpack.c.l.b16 %v195
    %v763 = vunpack.c.h.b16 %v195
    %v764 = vunpack.c.l.b16 %v196
    %v765 = vunpack.c.h.b16 %v196
    %v766 = vunpack.c.l.b16 %v197
    %v767 = vunpack.c.h.b16 %v197
    %v768 = vunpack.c.l.b16 %v198
    %v769 = vunpack.c.h.b16 %v198
    %v770 = vunpack.c.l.b16 %v199
    %v771 = vunpack.c.h.b16 %v199
    %v772 = vunpack.c.l.b16 %v200
    %v773 = vunpack.c.h.b16 %v200
    %v774 = vunpack.c.l.b16 %v201
    %v775 = vunpack.c.h.b16 %v201
    %v776 = vunpack.c.l.b16 %v202
    %v777 = vunpack.c.h.b16 %v202
    %v778 = vunpack.c.l.b16 %v203
    %v779 = vunpack.c.h.b16 %v203
    %v780 = vunpack.c.l.b16 %v204
    %v781 = vunpack.c.h.b16 %v204
    %v782 = vunpack.c.l.b16 %v205
    %v783 = vunpack.c.h.b16 %v205
    %v784 = vunpack.c.l.b16 %v206
    %v785 = vunpack.c.h.b16 %v206
    %v786 = vunpack.c.l.b16 %v207
    %v787 = vunpack.c.h.b16 %v207
    %v788 = vunpack.c.l.b16 %v208
    %v789 = vunpack.c.h.b16 %v208
    %v790 = vunpack.c.l.b16 %v209
    %v791 = vunpack.c.h.b16 %v209
    %v792 = vunpack.c.l.b16 %v210
    %v793 = vunpack.c.h.b16 %v210
    %v794 = vunpack.c.l.b16 %v211
    %v795 = vunpack.c.h.b16 %v211
    %v796 = vunpack.c.l.b16 %v212
    %v797 = vunpack.c.h.b16 %v212
    %v798 = vunpack.c.l.b16 %v213
    %v799 = vunpack.c.h.b16 %v213
    %v800 = vunpack.c.l.b16 %v214
    %v801 = vunpack.c.h.b16 %v214
    %v802 = vunpack.c.l.b16 %v215
    %v803 = vunpack.c.h.b16 %v215
    %v804 = vunpack.c.l.b16 %v216
    %v805 = vunpack.c.h.b16 %v216
    %v806 = vunpack.c.l.b16 %v217
    %v807 = vunpack.c.h.b16 %v217
    %v808 = vunpack.c.l.b16 %v218
    %v809 = vunpack.c.h.b16 %v218
    %v810 = vunpack.c.l.b16 %v219
    %v811 = vunpack.c.h.b16 %v219
    %v812 = vunpack.c.l.b16 %v220
    %v813 = vunpack.c.h.b16 %v220
    %v814 = vunpack.c.l.b16 %v221
    %v815 = vunpack.c.h.b16 %v221
    %v816 = vunpack.c.l.b16 %v222
    %v817 = vunpack.c.h.b16 %v222
    %v818 = vunpack.c.l.b16 %v223
    %v819 = vunpack.c.h.b16 %v223
    %v820 = vunpack.c.l.b16 %v224
    %v821 = vunpack.c.h.b16 %v224
    %v822 = vunpack.c.l.b16 %v225
    %v823 = vunpack.c.h.b16 %v225
    %v824 = vunpack.c.l.b16 %v226
    %v825 = vunpack.c.h.b16 %v226
    %v826 = vunpack.c.l.b16 %v227
    %v827 = vunpack.c.h.b16 %v227
    %v828 = vunpack.c.l.b16 %v228
    %v829 = vunpack.c.h.b16 %v228
    %v830 = vunpack.c.l.b16 %v229
    %v831 = vunpack.c.h.b16 %v229
    %v832 = vunpack.c.l.b16 %v230
    %v833 = vunpack.c.h.b16 %v230
    %v834 = vunpack.c.l.b16 %v231
    %v835 = vunpack.c.h.b16 %v231
    %v836 = vunpack.c.l.b16 %v232
    %v837 = vunpack.c.h.b16 %v232
    %v838 = vunpack.c.l.b16 %v233
    %v839 = vunpack.c.h.b16 %v233
    %v840 = vunpack.c.l.b16 %v234
    %v841 = vunpack.c.h.b16 %v234
    %v842 = vunpack.c.l.b16 %v235
    %v843 = vunpack.c.h.b16 %v235
    %v844 = vunpack.c.l.b16 %v236
    %v845 = vunpack.c.h.b16 %v236
    %v846 = vunpack.c.l.b16 %v237
    %v847 = vunpack.c.h.b16 %v237
    %v848 = vunpack.c.l.b16 %v238
    %v849 = vunpack.c.h.b16 %v238
    %v850 = vunpack.c.l.b16 %v239
    %v851 = vunpack.c.h.b16 %v239
    %v852 = vunpack.c.l.b16 %v240
    %v853 = vunpack.c.h.b16 %v240
    %v854 = vunpack.c.l.b16 %v241
    %v855 = vunpack.c.h.b16 %v241
    %v856 = vunpack.c.l.b16 %v242
    %v857 = vunpack.c.h.b16 %v242
    %v858 = vunpack.c.l.b16 %v243
    %v859 = vunpack.c.h.b16 %v243
    %v860 = vunpack.c.l.b16 %v244
    %v861 = vunpack.c.h.b16 %v244
    %v862 = vunpack.c.l.b16 %v245
    %v863 = vunpack.c.h.b16 %v245
    %v864 = vunpack.c.l.b16 %v246
    %v865 = vunpack.c.h.b16 %v246
    %v866 = vunpack.c.l.b16 %v247
    %v867 = vunpack.c.h.b16 %v247
    %v868 = vunpack.c.l.b16 %v248
    %v869 = vunpack.c.h.b16 %v248
    %v870 = vunpack.c.l.b16 %v249
    %v871 = vunpack.c.h.b16 %v249
    %v872 = vunpack.c.l.b16 %v250
    %v873 = vunpack.c.h.b16 %v250
    %v874 = vunpack.c.l.b16 %v251
    %v875 = vunpack.c.h.b16 %v251
    %v876 = vunpack.c.l.b16 %v252
    %v877 = vunpack.c.h.b16 %v252
    %v878 = vunpack.c.l.b16 %v253
    %v879 = vunpack.c.h.b16 %v253
    %v880 = vunpack.c.l.b16 %v254
    %v881 = vunpack.c.h.b16 %v254
    %v882 = vunpack.c.l.b16 %v255
    %v883 = vunpack.c.h.b16 %v255
    %v884 = vunpack.c.l.b16 %v256
    %v885 = vunpack.c.h.b16 %v256
    %v886 = vunpack.c.l.b16 %v257
    %v887 = vunpack.c.h.b16 %v257
    %v888 = vunpack.c.l.b16 %v258
    %v889 = vunpack.c.h.b16 %v258
    %v890 = vunpack.c.l.b16 %v259
    %v891 = vunpack.c.h.b16 %v259
    %v892 = vunpack.c.l.b16 %v260
    %v893 = vunpack.c.h.b16 %v260
    %v894 = vunpack.c.l.b16 %v261
    %v895 = vunpack.c.h.b16 %v261
    %v896 = vpack.c.b16 %v508, %v504
    %v897 = vpack.c.b16 %v509, %v505
    %v898 = vpack.c.b16 %v510, %v506
    %v899 = vpack.c.b16 %v511, %v507
    %v900 = vpack.c.b16 %v516, %v512
    %v901 = vpack.c.b16 %v517, %v513
    %v902 = vpack.c.b16 %v518, %v514
    %v903 = vpack.c.b16 %v519, %v515
    %v904 = vpack.c.b16 %v524, %v520
    %v905 = vpack.c.b16 %v525, %v521
    %v906 = vpack.c.b16 %v526, %v522
    %v907 = vpack.c.b16 %v527, %v523
    %v908 = vpack.c.b16 %v532, %v528
    %v909 = vpack.c.b16 %v533, %v529
    %v910 = vpack.c.b16 %v534, %v530
    %v911 = vpack.c.b16 %v535, %v531
    %v912 = vpack.c.b16 %v540, %v536
    %v913 = vpack.c.b16 %v541, %v537
    %v914 = vpack.c.b16 %v542, %v538
    %v915 = vpack.c.b16 %v543, %v539
    %v916 = vpack.c.b16 %v548, %v544
    %v917 = vpack.c.b16 %v549, %v545
    %v918 = vpack.c.b16 %v550, %v546
    %v919 = vpack.c.b16 %v551, %v547
    %v920 = vpack.c.b16 %v556, %v552
    %v921 = vpack.c.b16 %v557, %v553
    %v922 = vpack.c.b16 %v558, %v554
    %v923 = vpack.c.b16 %v559, %v555
    %v924 = vpack.c.b16 %v564, %v560
    %v925 = vpack.c.b16 %v565, %v561
    %v926 = vpack.c.b16 %v566, %v562
    %v927 = vpack.c.b16 %v567, %v563
    %v928 = vpack.c.b16 %v572, %v568
    %v929 = vpack.c.b16 %v573, %v569
    %v930 = vpack.c.b16 %v574, %v570
    %v931 = vpack.c.b16 %v575, %v571
    %v932 = vpack.c.b16 %v580, %v576
    %v933 = vpack.c.b16 %v581, %v577
    %v934 = vpack.c.b16 %v582, %v578
    %v935 = vpack.c.b16 %v583, %v579
    %v936 = vpack.c.b16 %v588, %v584
    %v937 = vpack.c.b16 %v589, %v585
    %v938 = vpack.c.b16 %v590, %v586
    %v939 = vpack.c.b16 %v591, %v587
    %v940 = vpack.c.b16 %v596, %v592
    %v941 = vpack.c.b16 %v597, %v593
    %v942 = vpack.c.b16 %v598, %v594
    %v943 = vpack.c.b16 %v599, %v595
    %v944 = vpack.c.b16 %v604, %v600
    %v945 = vpack.c.b16 %v605, %v601
    %v946 = vpack.c.b16 %v606, %v602
    %v947 = vpack.c.b16 %v607, %v603
    %v948 = vpack.c.b16 %v612, %v608
    %v949 = vpack.c.b16 %v613, %v609
    %v950 = vpack.c.b16 %v614, %v610
    %v951 = vpack.c.b16 %v615, %v611
    %v952 = vpack.c.b16 %v620, %v616
    %v953 = vpack.c.b16 %v621, %v617
    %v954 = vpack.c.b16 %v622, %v618
    %v955 = vpack.c.b16 %v623, %v619
    %v956 = vpack.c.b16 %v628, %v624
    %v957 = vpack.c.b16 %v629, %v625
    %v958 = vpack.c.b16 %v630, %v626
    %v959 = vpack.c.b16 %v631, %v627
    %v960 = vpack.c.b16 %v636, %v632
    %v961 = vpack.c.b16 %v637, %v633
    %v962 = vpack.c.b16 %v638, %v634
    %v963 = vpack.c.b16 %v639, %v635
    %v964 = vpack.c.b16 %v644, %v640
    %v965 = vpack.c.b16 %v645, %v641
    %v966 = vpack.c.b16 %v646, %v642
    %v967 = vpack.c.b16 %v647, %v643
    %v968 = vpack.c.b16 %v652, %v648
    %v969 = vpack.c.b16 %v653, %v649
    %v970 = vpack.c.b16 %v654, %v650
    %v971 = vpack.c.b16 %v655, %v651
    %v972 = vpack.c.b16 %v660, %v656
    %v973 = vpack.c.b16 %v661, %v657
    %v974 = vpack.c.b16 %v662, %v658
    %v975 = vpack.c.b16 %v663, %v659
    %v976 = vpack.c.b16 %v668, %v664
    %v977 = vpack.c.b16 %v669, %v665
    %v978 = vpack.c.b16 %v670, %v666
    %v979 = vpack.c.b16 %v671, %v667
    %v980 = vpack.c.b16 %v676, %v672
    %v981 = vpack.c.b16 %v677, %v673
    %v982 = vpack.c.b16 %v678, %v674
    %v983 = vpack.c.b16 %v679, %v675
    %v984 = vpack.c.b16 %v684, %v680
    %v985 = vpack.c.b16 %v685, %v681
    %v986 = vpack.c.b16 %v686, %v682
    %v987 = vpack.c.b16 %v687, %v683
    %v988 = vpack.c.b16 %v692, %v688
    %v989 = vpack.c.b16 %v693, %v689
    %v990 = vpack.c.b16 %v694, %v690
    %v991 = vpack.c.b16 %v695, %v691
    %v992 = vpack.c.b16 %v700, %v696
    %v993 = vpack.c.b16 %v701, %v697
    %v994 = vpack.c.b16 %v702, %v698
    %v995 = vpack.c.b16 %v703, %v699
    %v996 = vpack.c.b16 %v708, %v704
    %v997 = vpack.c.b16 %v709, %v705
    %v998 = vpack.c.b16 %v710, %v706
    %v999 = vpack.c.b16 %v711, %v707
    %v1000 = vpack.c.b16 %v716, %v712
    %v1001 = vpack.c.b16 %v717, %v713
    %v1002 = vpack.c.b16 %v718, %v714
    %v1003 = vpack.c.b16 %v719, %v715
    %v1004 = vpack.c.b16 %v724, %v720
    %v1005 = vpack.c.b16 %v725, %v721
    %v1006 = vpack.c.b16 %v726, %v722
    %v1007 = vpack.c.b16 %v727, %v723
    %v1008 = vpack.c.b16 %v732, %v728
    %v1009 = vpack.c.b16 %v733, %v729
    %v1010 = vpack.c.b16 %v734, %v730
    %v1011 = vpack.c.b16 %v735, %v731
    %v1012 = vpack.c.b16 %v740, %v736
    %v1013 = vpack.c.b16 %v741, %v737
    %v1014 = vpack.c.b16 %v742, %v738
    %v1015 = vpack.c.b16 %v743, %v739
    %v1016 = vpack.c.b16 %v748, %v744
    %v1017 = vpack.c.b16 %v749, %v745
    %v1018 = vpack.c.b16 %v750, %v746
    %v1019 = vpack.c.b16 %v751, %v747
    %v1020 = vpack.c.b16 %v756, %v752
    %v1021 = vpack.c.b16 %v757, %v753
    %v1022 = vpack.c.b16 %v758, %v754
    %v1023 = vpack.c.b16 %v759, %v755
    %v1024 = vpack.c.b16 %v764, %v760
    %v1025 = vpack.c.b16 %v765, %v761
    %v1026 = vpack.c.b16 %v766, %v762
    %v1027 = vpack.c.b16 %v767, %v763
    %v1028 = vpack.c.b16 %v772, %v768
    %v1029 = vpack.c.b16 %v773, %v769
    %v1030 = vpack.c.b16 %v774, %v770
    %v1031 = vpack.c.b16 %v775, %v771
    %v1032 = vpack.c.b16 %v780, %v776
    %v1033 = vpack.c.b16 %v781, %v777
    %v1034 = vpack.c.b16 %v782, %v778
    %v1035 = vpack.c.b16 %v783, %v779
    %v1036 = vpack.c.b16 %v788, %v784
    %v1037 = vpack.c.b16 %v789, %v785
    %v1038 = vpack.c.b16 %v790, %v786
    %v1039 = vpack.c.b16 %v791, %v787
    %v1040 = vpack.c.b16 %v796, %v792
    %v1041 = vpack.c.b16 %v797, %v793
    %v1042 = vpack.c.b16 %v798, %v794
    %v1043 = vpack.c.b16 %v799, %v795
    %v1044 = vpack.c.b16 %v804, %v800
    %v1045 = vpack.c.b16 %v805, %v801
    %v1046 = vpack.c.b16 %v806, %v802
    %v1047 = vpack.c.b16 %v807, %v803
    %v1048 = vpack.c.b16 %v812, %v808
    %v1049 = vpack.c.b16 %v813, %v809
    %v1050 = vpack.c.b16 %v814, %v810
    %v1051 = vpack.c.b16 %v815, %v811
    %v1052 = vpack.c.b16 %v820, %v816
    %v1053 = vpack.c.b16 %v821, %v817
    %v1054 = vpack.c.b16 %v822, %v818
    %v1055 = vpack.c.b16 %v823, %v819
    %v1056 = vpack.c.b16 %v828, %v824
    %v1057 = vpack.c.b16 %v829, %v825
    %v1058 = vpack.c.b16 %v830, %v826
    %v1059 = vpack.c.b16 %v831, %v827
    %v1060 = vpack.c.b16 %v836, %v832
    %v1061 = vpack.c.b16 %v837, %v833
    %v1062 = vpack.c.b16 %v838, %v834
    %v1063 = vpack.c.b16 %v839, %v835
    %v1064 = vpack.c.b16 %v844, %v840
    %v1065 = vpack.c.b16 %v845, %v841
    %v1066 = vpack.c.b16 %v846, %v842
    %v1067 = vpack.c.b16 %v847, %v843
    %v1068 = vpack.c.b16 %v852, %v848
    %v1069 = vpack.c.b16 %v853, %v849
    %v1070 = vpack.c.b16 %v854, %v850
    %v1071 = vpack.c.b16 %v855, %v851
    %v1072 = vpack.c.b16 %v860, %v856
    %v1073 = vpack.c.b16 %v861, %v857
    %v1074 = vpack.c.b16 %v862, %v858
    %v1075 = vpack.c.b16 %v863, %v859
    %v1076 = vpack.c.b16 %v868, %v864
    %v1077 = vpack.c.b16 %v869, %v865
    %v1078 = vpack.c.b16 %v870, %v866
    %v1079 = vpack.c.b16 %v871, %v867
    %v1080 = vpack.c.b16 %v876, %v872
    %v1081 = vpack.c.b16 %v877, %v873
    %v1082 = vpack.c.b16 %v878, %v874
    %v1083 = vpack.c.b16 %v879, %v875
    %v1084 = vpack.c.b16 %v884, %v880
    %v1085 = vpack.c.b16 %v885, %v881
    %v1086 = vpack.c.b16 %v886, %v882
    %v1087 = vpack.c.b16 %v887, %v883
    %v1088 = vpack.c.b16 %v892, %v888
    %v1089 = vpack.c.b16 %v893, %v889
    %v1090 = vpack.c.b16 %v894, %v890
    %v1091 = vpack.c.b16 %v895, %v891
    %vm1288 = vcmask 130048
    %v1290 = vsel %vm1288, %v301, 0
    %1292 = vmatprep.subr.bf16.mxu0 %v925
    %1293 = vmatpush1.bf16.msra.mxu0 %v924
    %1294 = vmatprep.subr.bf16.mxu0 %v921
    %1295 = vmatpush1.bf16.msra.mxu0 %v920
    %1296 = vmatprep.subr.bf16.mxu0 %v917
    %1297 = vmatpush1.bf16.msra.mxu0 %v916
    %1298 = vmatprep.subr.bf16.mxu0 %v913
    %1299 = vmatpush1.bf16.msra.mxu0 %v912
    %1300 = vmatprep.subr.bf16.mxu0 %v909
    %1301 = vmatpush1.bf16.msra.mxu0 %v908
    %1302 = vmatprep.subr.bf16.mxu0 %v905
    %1303 = vmatpush1.bf16.msra.mxu0 %v904
    %1304 = vmatprep.subr.bf16.mxu0 %v901
    %1305 = vmatpush1.bf16.msra.mxu0 %v900
    %1306 = vmatprep.subr.bf16.mxu0 %v897
    %1307 = vmatpush1.bf16.msra.mxu0 %v896
    %1308 = vmatprep.subr.bf16.mxu0 %v957
    %1309 = vmatpush2.bf16.msra.mxu0 %v956
    %1310 = vmatprep.subr.bf16.mxu0 %v953
    %1311 = vmatpush2.bf16.msra.mxu0 %v952
    %1312 = vmatprep.subr.bf16.mxu0 %v949
    %1313 = vmatpush2.bf16.msra.mxu0 %v948
    %1314 = vmatprep.subr.bf16.mxu0 %v945
    %1315 = vmatpush2.bf16.msra.mxu0 %v944
    %1316 = vmatprep.subr.bf16.mxu0 %v941
    %1317 = vmatpush2.bf16.msra.mxu0 %v940
    %1318 = vmatprep.subr.bf16.mxu0 %v937
    %1319 = vmatpush2.bf16.msra.mxu0 %v936
    %1320 = vmatprep.subr.bf16.mxu0 %v933
    %1321 = vmatpush2.bf16.msra.mxu0 %v932
    %1322 = vmatprep.subr.bf16.mxu0 %v929
    %1323 = vmatpush2.bf16.msra.mxu0 %v928
    %1324 = vmatprep.mubr.bf16.mxu0 %v296
    %1325 = vmatmul.mubr.bf16.gmra.mxu0 %v295
    %v1326 = vpop.f32.mrf.mxu0
    %v1327 = vadd.f32 %v267, %v1326
    %v1328 = vpop.f32.mrf.mxu0
    %v1329 = vadd.f32 %v271, %v1328
    %v1330 = vpop.f32.mrf.mxu0
    %v1331 = vpop.f32.mrf.mxu0
    %1332 = vdwg.mxu0
    %1333 = vmatprep.subr.bf16.mxu0 %v989
    %1334 = vmatpush1.bf16.msra.mxu0 %v988
    %1335 = vmatprep.subr.bf16.mxu0 %v985
    %1336 = vmatpush1.bf16.msra.mxu0 %v984
    %1337 = vmatprep.subr.bf16.mxu0 %v981
    %1338 = vmatpush1.bf16.msra.mxu0 %v980
    %1339 = vmatprep.subr.bf16.mxu0 %v977
    %1340 = vmatpush1.bf16.msra.mxu0 %v976
    %1341 = vmatprep.subr.bf16.mxu0 %v973
    %1342 = vmatpush1.bf16.msra.mxu0 %v972
    %1343 = vmatprep.subr.bf16.mxu0 %v969
    %1344 = vmatpush1.bf16.msra.mxu0 %v968
    %1345 = vmatprep.subr.bf16.mxu0 %v965
    %1346 = vmatpush1.bf16.msra.mxu0 %v964
    %1347 = vmatprep.subr.bf16.mxu0 %v961
    %1348 = vmatpush1.bf16.msra.mxu0 %v960
    %1349 = vmatprep.subr.bf16.mxu0 %v1021
    %1350 = vmatpush2.bf16.msra.mxu0 %v1020
    %1351 = vmatprep.subr.bf16.mxu0 %v1017
    %1352 = vmatpush2.bf16.msra.mxu0 %v1016
    %1353 = vmatprep.subr.bf16.mxu0 %v1013
    %1354 = vmatpush2.bf16.msra.mxu0 %v1012
    %1355 = vmatprep.subr.bf16.mxu0 %v1009
    %1356 = vmatpush2.bf16.msra.mxu0 %v1008
    %1357 = vmatprep.subr.bf16.mxu0 %v1005
    %1358 = vmatpush2.bf16.msra.mxu0 %v1004
    %1359 = vmatprep.subr.bf16.mxu0 %v1001
    %1360 = vmatpush2.bf16.msra.mxu0 %v1000
    %1361 = vmatprep.subr.bf16.mxu0 %v997
    %1362 = vmatpush2.bf16.msra.mxu0 %v996
    %1363 = vmatprep.subr.bf16.mxu0 %v993
    %1364 = vmatpush2.bf16.msra.mxu0 %v992
    %1365 = vmatprep.mubr.bf16.mxu0 %v298
    %1366 = vmatmul.mubr.bf16.gmra.mxu0 %v297
    %v1367 = vpop.f32.mrf.mxu0
    %v1368 = vadd.f32 %v1327, %v1367
    %v1369 = vpop.f32.mrf.mxu0
    %v1370 = vadd.f32 %v1329, %v1369
    %v1371 = vpop.f32.mrf.mxu0
    %v1372 = vpop.f32.mrf.mxu0
    %1373 = vdwg.mxu0
    %1374 = vmatprep.subr.bf16.mxu0 %v1053
    %1375 = vmatpush1.bf16.msra.mxu0 %v1052
    %1376 = vmatprep.subr.bf16.mxu0 %v1049
    %1377 = vmatpush1.bf16.msra.mxu0 %v1048
    %1378 = vmatprep.subr.bf16.mxu0 %v1045
    %1379 = vmatpush1.bf16.msra.mxu0 %v1044
    %1380 = vmatprep.subr.bf16.mxu0 %v1041
    %1381 = vmatpush1.bf16.msra.mxu0 %v1040
    %1382 = vmatprep.subr.bf16.mxu0 %v1037
    %1383 = vmatpush1.bf16.msra.mxu0 %v1036
    %1384 = vmatprep.subr.bf16.mxu0 %v1033
    %1385 = vmatpush1.bf16.msra.mxu0 %v1032
    %1386 = vmatprep.subr.bf16.mxu0 %v1029
    %1387 = vmatpush1.bf16.msra.mxu0 %v1028
    %1388 = vmatprep.subr.bf16.mxu0 %v1025
    %1389 = vmatpush1.bf16.msra.mxu0 %v1024
    %1390 = vmatprep.subr.bf16.mxu0 %v1085
    %1391 = vmatpush2.bf16.msra.mxu0 %v1084
    %1392 = vmatprep.subr.bf16.mxu0 %v1081
    %1393 = vmatpush2.bf16.msra.mxu0 %v1080
    %1394 = vmatprep.subr.bf16.mxu0 %v1077
    %1395 = vmatpush2.bf16.msra.mxu0 %v1076
    %1396 = vmatprep.subr.bf16.mxu0 %v1073
    %1397 = vmatpush2.bf16.msra.mxu0 %v1072
    %1398 = vmatprep.subr.bf16.mxu0 %v1069
    %1399 = vmatpush2.bf16.msra.mxu0 %v1068
    %1400 = vmatprep.subr.bf16.mxu0 %v1065
    %1401 = vmatpush2.bf16.msra.mxu0 %v1064
    %1402 = vmatprep.subr.bf16.mxu0 %v1061
    %1403 = vmatpush2.bf16.msra.mxu0 %v1060
    %1404 = vmatprep.subr.bf16.mxu0 %v1057
    %1405 = vmatpush2.bf16.msra.mxu0 %v1056
    %1406 = vmatprep.mubr.bf16.mxu0 %v300
    %1407 = vmatmul.mubr.bf16.gmra.mxu0 %v299
    %v1408 = vpop.f32.mrf.mxu0
    %v1409 = vadd.f32 %v1368, %v1408
    %v1410 = vpop.f32.mrf.mxu0
    %v1411 = vadd.f32 %v1370, %v1410
    %v1412 = vpop.f32.mrf.mxu0
    %v1413 = vpop.f32.mrf.mxu0
    %1414 = vdwg.mxu0
    %1415 = vmatprep.subr.bf16.mxu0 0
    %1416 = vmatpush1.bf16.msra.mxu0 0
    %1417 = vmatprep.subr.bf16.mxu0 0
    %1418 = vmatpush1.bf16.msra.mxu0 0
    %1419 = vmatprep.subr.bf16.mxu0 0
    %1420 = vmatpush1.bf16.msra.mxu0 0
    %1421 = vmatprep.subr.bf16.mxu0 0
    %1422 = vmatpush1.bf16.msra.mxu0 0
    %1423 = vmatprep.subr.bf16.mxu0 0
    %1424 = vmatpush1.bf16.msra.mxu0 0
    %1425 = vmatprep.subr.bf16.mxu0 0
    %1426 = vmatpush1.bf16.msra.mxu0 0
    %1427 = vmatprep.subr.bf16.mxu0 0
    %1428 = vmatpush1.bf16.msra.mxu0 0
    %1429 = vmatprep.subr.bf16.mxu0 %v1089
    %1430 = vmatpush1.bf16.msra.mxu0 %v1088
    %1431 = vmatprep.subr.bf16.mxu0 0
    %1432 = vmatpush2.bf16.msra.mxu0 0
    %1433 = vmatprep.subr.bf16.mxu0 0
    %1434 = vmatpush2.bf16.msra.mxu0 0
    %1435 = vmatprep.subr.bf16.mxu0 0
    %1436 = vmatpush2.bf16.msra.mxu0 0
    %1437 = vmatprep.subr.bf16.mxu0 0
    %1438 = vmatpush2.bf16.msra.mxu0 0
    %1439 = vmatprep.subr.bf16.mxu0 0
    %1440 = vmatpush2.bf16.msra.mxu0 0
    %1441 = vmatprep.subr.bf16.mxu0 0
    %1442 = vmatpush2.bf16.msra.mxu0 0
    %1443 = vmatprep.subr.bf16.mxu0 0
    %1444 = vmatpush2.bf16.msra.mxu0 0
    %1445 = vmatprep.subr.bf16.mxu0 0
    %1446 = vmatpush2.bf16.msra.mxu0 0
    %1447 = vmatprep.mubr.bf16.mxu0 0
    %1448 = vmatmul.mubr.bf16.gmra.mxu0 %v1290
    %v1449 = vpop.f32.mrf.mxu0
    %v1450 = vadd.f32 %v1409, %v1449
    %v1451 = vpop.f32.mrf.mxu0
    %v1452 = vadd.f32 %v1411, %v1451
    %v1453 = vpop.f32.mrf.mxu0
    %v1454 = vpop.f32.mrf.mxu0
    %1455 = vdwg.mxu0
    %1456 = vmatprep.subr.bf16.mxu0 %v927
    %1457 = vmatpush1.bf16.msra.mxu0 %v926
    %1458 = vmatprep.subr.bf16.mxu0 %v923
    %1459 = vmatpush1.bf16.msra.mxu0 %v922
    %1460 = vmatprep.subr.bf16.mxu0 %v919
    %1461 = vmatpush1.bf16.msra.mxu0 %v918
    %1462 = vmatprep.subr.bf16.mxu0 %v915
    %1463 = vmatpush1.bf16.msra.mxu0 %v914
    %1464 = vmatprep.subr.bf16.mxu0 %v911
    %1465 = vmatpush1.bf16.msra.mxu0 %v910
    %1466 = vmatprep.subr.bf16.mxu0 %v907
    %1467 = vmatpush1.bf16.msra.mxu0 %v906
    %1468 = vmatprep.subr.bf16.mxu0 %v903
    %1469 = vmatpush1.bf16.msra.mxu0 %v902
    %1470 = vmatprep.subr.bf16.mxu0 %v899
    %1471 = vmatpush1.bf16.msra.mxu0 %v898
    %1472 = vmatprep.subr.bf16.mxu0 %v959
    %1473 = vmatpush2.bf16.msra.mxu0 %v958
    %1474 = vmatprep.subr.bf16.mxu0 %v955
    %1475 = vmatpush2.bf16.msra.mxu0 %v954
    %1476 = vmatprep.subr.bf16.mxu0 %v951
    %1477 = vmatpush2.bf16.msra.mxu0 %v950
    %1478 = vmatprep.subr.bf16.mxu0 %v947
    %1479 = vmatpush2.bf16.msra.mxu0 %v946
    %1480 = vmatprep.subr.bf16.mxu0 %v943
    %1481 = vmatpush2.bf16.msra.mxu0 %v942
    %1482 = vmatprep.subr.bf16.mxu0 %v939
    %1483 = vmatpush2.bf16.msra.mxu0 %v938
    %1484 = vmatprep.subr.bf16.mxu0 %v935
    %1485 = vmatpush2.bf16.msra.mxu0 %v934
    %1486 = vmatprep.subr.bf16.mxu0 %v931
    %1487 = vmatpush2.bf16.msra.mxu0 %v930
    %1488 = vmatprep.mubr.bf16.mxu0 %v296
    %1489 = vmatmul.mubr.bf16.gmra.mxu0 %v295
    %v1490 = vpop.f32.mrf.mxu0
    %v1491 = vadd.f32 %v275, %v1490
    %v1492 = vpop.f32.mrf.mxu0
    %v1493 = vadd.f32 %v279, %v1492
    %v1494 = vpop.f32.mrf.mxu0
    %v1495 = vpop.f32.mrf.mxu0
    %1496 = vdwg.mxu0
    %1497 = vmatprep.subr.bf16.mxu0 %v991
    %1498 = vmatpush1.bf16.msra.mxu0 %v990
    %1499 = vmatprep.subr.bf16.mxu0 %v987
    %1500 = vmatpush1.bf16.msra.mxu0 %v986
    %1501 = vmatprep.subr.bf16.mxu0 %v983
    %1502 = vmatpush1.bf16.msra.mxu0 %v982
    %1503 = vmatprep.subr.bf16.mxu0 %v979
    %1504 = vmatpush1.bf16.msra.mxu0 %v978
    %1505 = vmatprep.subr.bf16.mxu0 %v975
    %1506 = vmatpush1.bf16.msra.mxu0 %v974
    %1507 = vmatprep.subr.bf16.mxu0 %v971
    %1508 = vmatpush1.bf16.msra.mxu0 %v970
    %1509 = vmatprep.subr.bf16.mxu0 %v967
    %1510 = vmatpush1.bf16.msra.mxu0 %v966
    %1511 = vmatprep.subr.bf16.mxu0 %v963
    %1512 = vmatpush1.bf16.msra.mxu0 %v962
    %1513 = vmatprep.subr.bf16.mxu0 %v1023
    %1514 = vmatpush2.bf16.msra.mxu0 %v1022
    %1515 = vmatprep.subr.bf16.mxu0 %v1019
    %1516 = vmatpush2.bf16.msra.mxu0 %v1018
    %1517 = vmatprep.subr.bf16.mxu0 %v1015
    %1518 = vmatpush2.bf16.msra.mxu0 %v1014
    %1519 = vmatprep.subr.bf16.mxu0 %v1011
    %1520 = vmatpush2.bf16.msra.mxu0 %v1010
    %1521 = vmatprep.subr.bf16.mxu0 %v1007
    %1522 = vmatpush2.bf16.msra.mxu0 %v1006
    %1523 = vmatprep.subr.bf16.mxu0 %v1003
    %1524 = vmatpush2.bf16.msra.mxu0 %v1002
    %1525 = vmatprep.subr.bf16.mxu0 %v999
    %1526 = vmatpush2.bf16.msra.mxu0 %v998
    %1527 = vmatprep.subr.bf16.mxu0 %v995
    %1528 = vmatpush2.bf16.msra.mxu0 %v994
    %1529 = vmatprep.mubr.bf16.mxu0 %v298
    %1530 = vmatmul.mubr.bf16.gmra.mxu0 %v297
    %v1531 = vpop.f32.mrf.mxu0
    %v1532 = vadd.f32 %v1491, %v1531
    %v1533 = vpop.f32.mrf.mxu0
    %v1534 = vadd.f32 %v1493, %v1533
    %v1535 = vpop.f32.mrf.mxu0
    %v1536 = vpop.f32.mrf.mxu0
    %1537 = vdwg.mxu0
    %1538 = vmatprep.subr.bf16.mxu0 %v1055
    %1539 = vmatpush1.bf16.msra.mxu0 %v1054
    %1540 = vmatprep.subr.bf16.mxu0 %v1051
    %1541 = vmatpush1.bf16.msra.mxu0 %v1050
    %1542 = vmatprep.subr.bf16.mxu0 %v1047
    %1543 = vmatpush1.bf16.msra.mxu0 %v1046
    %1544 = vmatprep.subr.bf16.mxu0 %v1043
    %1545 = vmatpush1.bf16.msra.mxu0 %v1042
    %1546 = vmatprep.subr.bf16.mxu0 %v1039
    %1547 = vmatpush1.bf16.msra.mxu0 %v1038
    %1548 = vmatprep.subr.bf16.mxu0 %v1035
    %1549 = vmatpush1.bf16.msra.mxu0 %v1034
    %1550 = vmatprep.subr.bf16.mxu0 %v1031
    %1551 = vmatpush1.bf16.msra.mxu0 %v1030
    %1552 = vmatprep.subr.bf16.mxu0 %v1027
    %1553 = vmatpush1.bf16.msra.mxu0 %v1026
    %1554 = vmatprep.subr.bf16.mxu0 %v1087
    %1555 = vmatpush2.bf16.msra.mxu0 %v1086
    %1556 = vmatprep.subr.bf16.mxu0 %v1083
    %1557 = vmatpush2.bf16.msra.mxu0 %v1082
    %1558 = vmatprep.subr.bf16.mxu0 %v1079
    %1559 = vmatpush2.bf16.msra.mxu0 %v1078
    %1560 = vmatprep.subr.bf16.mxu0 %v1075
    %1561 = vmatpush2.bf16.msra.mxu0 %v1074
    %1562 = vmatprep.subr.bf16.mxu0 %v1071
    %1563 = vmatpush2.bf16.msra.mxu0 %v1070
    %1564 = vmatprep.subr.bf16.mxu0 %v1067
    %1565 = vmatpush2.bf16.msra.mxu0 %v1066
    %1566 = vmatprep.subr.bf16.mxu0 %v1063
    %1567 = vmatpush2.bf16.msra.mxu0 %v1062
    %1568 = vmatprep.subr.bf16.mxu0 %v1059
    %1569 = vmatpush2.bf16.msra.mxu0 %v1058
    %1570 = vmatprep.mubr.bf16.mxu0 %v300
    %1571 = vmatmul.mubr.bf16.gmra.mxu0 %v299
    %v1572 = vpop.f32.mrf.mxu0
    %v1573 = vadd.f32 %v1532, %v1572
    %v1574 = vpop.f32.mrf.mxu0
    %v1575 = vadd.f32 %v1534, %v1574
    %v1576 = vpop.f32.mrf.mxu0
    %v1577 = vpop.f32.mrf.mxu0
    %1578 = vdwg.mxu0
    %1579 = vmatprep.subr.bf16.mxu0 0
    %1580 = vmatpush1.bf16.msra.mxu0 0
    %1581 = vmatprep.subr.bf16.mxu0 0
    %1582 = vmatpush1.bf16.msra.mxu0 0
    %1583 = vmatprep.subr.bf16.mxu0 0
    %1584 = vmatpush1.bf16.msra.mxu0 0
    %1585 = vmatprep.subr.bf16.mxu0 0
    %1586 = vmatpush1.bf16.msra.mxu0 0
    %1587 = vmatprep.subr.bf16.mxu0 0
    %1588 = vmatpush1.bf16.msra.mxu0 0
    %1589 = vmatprep.subr.bf16.mxu0 0
    %1590 = vmatpush1.bf16.msra.mxu0 0
    %1591 = vmatprep.subr.bf16.mxu0 0
    %1592 = vmatpush1.bf16.msra.mxu0 0
    %1593 = vmatprep.subr.bf16.mxu0 %v1091
    %1594 = vmatpush1.bf16.msra.mxu0 %v1090
    %1595 = vmatprep.subr.bf16.mxu0 0
    %1596 = vmatpush2.bf16.msra.mxu0 0
    %1597 = vmatprep.subr.bf16.mxu0 0
    %1598 = vmatpush2.bf16.msra.mxu0 0
    %1599 = vmatprep.subr.bf16.mxu0 0
    %1600 = vmatpush2.bf16.msra.mxu0 0
    %1601 = vmatprep.subr.bf16.mxu0 0
    %1602 = vmatpush2.bf16.msra.mxu0 0
    %1603 = vmatprep.subr.bf16.mxu0 0
    %1604 = vmatpush2.bf16.msra.mxu0 0
    %1605 = vmatprep.subr.bf16.mxu0 0
    %1606 = vmatpush2.bf16.msra.mxu0 0
    %1607 = vmatprep.subr.bf16.mxu0 0
    %1608 = vmatpush2.bf16.msra.mxu0 0
    %1609 = vmatprep.subr.bf16.mxu0 0
    %1610 = vmatpush2.bf16.msra.mxu0 0
    %1611 = vmatprep.mubr.bf16.mxu0 0
    %1612 = vmatmul.mubr.bf16.gmra.mxu0 %v1290
    %v1613 = vpop.f32.mrf.mxu0
    %v1614 = vadd.f32 %v1573, %v1613
    %v1615 = vpop.f32.mrf.mxu0
    %v1616 = vadd.f32 %v1575, %v1615
    %v1617 = vpop.f32.mrf.mxu0
    %v1618 = vpop.f32.mrf.mxu0
    %1619 = vdwg.mxu0
    %v1620 = vmax.f32 %v1450, 0.0
    %v1621 = vmax.f32 %v1452, 0.0
    %v1622 = vmax.f32 %v1614, 0.0
    %v1623 = vmax.f32 %v1616, 0.0
    %v1624 = vpack.c.bf16 %v1620, %v1620
    %v1625 = vpack.c.bf16 %v1621, %v1621
    %v1626 = vpack.c.bf16 %v1622, %v1622
    %v1627 = vpack.c.bf16 %v1623, %v1623
    %v1628 = vld [vmem:[%s3] sm:$0xff]
    %v1629 = vld [vmem:[%s3 + $0x8] sm:$0xff]
    %v1630 = vld [vmem:[%s3 + $0x10] sm:$0xff]
    %v1631 = vld [vmem:[%s3 + $0x18] sm:$0xff]
    %v1632 = vld [vmem:[%s3 + $0x20] sm:$0xff]
    %v1633 = vld [vmem:[%s3 + $0x28] sm:$0xff]
    %v1634 = vld [vmem:[%s3 + $0x30] sm:$0xff]
    %v1635 = vld [vmem:[%s3 + $0x38] sm:$0xff]
    %v1636 = vld [vmem:[%s3 + $0x40] sm:$0xff]
    %v1637 = vld [vmem:[%s3 + $0x48] sm:$0xff]
    %v1638 = vld [vmem:[%s3 + $0x50] sm:$0xff]
    %v1639 = vld [vmem:[%s3 + $0x58] sm:$0xff]
    %v1640 = vld [vmem:[%s3 + $0x60] sm:$0xff]
    %v1641 = vld [vmem:[%s3 + $0x68] sm:$0xff]
    %v1642 = vld [vmem:[%s3 + $0x70] sm:$0xff]
    %v1643 = vld [vmem:[%s3 + $0x78] sm:$0xff]
    %v1644 = vld [vmem:[%s3 + $0x80] sm:$0xff]
    %v1645 = vld [vmem:[%s3 + $0x88] sm:$0xff]
    %v1646 = vld [vmem:[%s3 + $0x90] sm:$0xff]
    %v1647 = vld [vmem:[%s3 + $0x98] sm:$0xff]
    %v1648 = vld [vmem:[%s3 + $0xa0] sm:$0xff]
    %v1649 = vld [vmem:[%s3 + $0xa8] sm:$0xff]
    %v1650 = vld [vmem:[%s3 + $0xb0] sm:$0xff]
    %v1651 = vld [vmem:[%s3 + $0xb8] sm:$0xff]
    %v1652 = vld [vmem:[%s3 + $0xc0] sm:$0xff]
    %v1653 = vld [vmem:[%s3 + $0xc8] sm:$0xff]
    %v1654 = vld [vmem:[%s3 + $0xd0] sm:$0xff]
    %v1655 = vld [vmem:[%s3 + $0xd8] sm:$0xff]
    %v1656 = vld [vmem:[%s3 + $0xe0] sm:$0xff]
    %v1657 = vld [vmem:[%s3 + $0xe8] sm:$0xff]
    %v1658 = vld [vmem:[%s3 + $0xf0] sm:$0xff]
    %v1659 = vld [vmem:[%s3 + $0xf8] sm:$0xff]
    %v1660 = vld [vmem:[%s3 + $0x100] sm:$0xff]
    %v1661 = vld [vmem:[%s3 + $0x108] sm:$0xff]
    %v1662 = vld [vmem:[%s3 + $0x110] sm:$0xff]
    %v1663 = vld [vmem:[%s3 + $0x118] sm:$0xff]
    %v1664 = vld [vmem:[%s3 + $0x120] sm:$0xff]
    %v1665 = vld [vmem:[%s3 + $0x128] sm:$0xff]
    %v1666 = vld [vmem:[%s3 + $0x130] sm:$0xff]
    %v1667 = vld [vmem:[%s3 + $0x138] sm:$0xff]
    %v1668 = vld [vmem:[%s3 + $0x140] sm:$0xff]
    %v1669 = vld [vmem:[%s3 + $0x148] sm:$0xff]
    %v1670 = vld [vmem:[%s3 + $0x150] sm:$0xff]
    %v1671 = vld [vmem:[%s3 + $0x158] sm:$0xff]
    %v1672 = vld [vmem:[%s3 + $0x160] sm:$0xff]
    %v1673 = vld [vmem:[%s3 + $0x168] sm:$0xff]
    %v1674 = vld [vmem:[%s3 + $0x170] sm:$0xff]
    %v1675 = vld [vmem:[%s3 + $0x178] sm:$0xff]
    %v1676 = vld [vmem:[%s3 + $0x180] sm:$0xff]
    %v1677 = vld [vmem:[%s3 + $0x188] sm:$0xff]
    %v1678 = vld [vmem:[%s3 + $0x190] sm:$0xff]
    %v1679 = vld [vmem:[%s3 + $0x198] sm:$0xff]
    %v1680 = vld [vmem:[%s3 + $0x1a0] sm:$0xff]
    %v1681 = vld [vmem:[%s3 + $0x1a8] sm:$0xff]
    %v1682 = vld [vmem:[%s3 + $0x1b0] sm:$0xff]
    %v1683 = vld [vmem:[%s3 + $0x1b8] sm:$0xff]
    %v1684 = vld [vmem:[%s3 + $0x1c0] sm:$0xff]
    %v1685 = vld [vmem:[%s3 + $0x1c8] sm:$0xff]
    %v1686 = vld [vmem:[%s3 + $0x1d0] sm:$0xff]
    %v1687 = vld [vmem:[%s3 + $0x1d8] sm:$0xff]
    %v1688 = vld [vmem:[%s3 + $0x1e0] sm:$0xff]
    %v1689 = vld [vmem:[%s3 + $0x1e8] sm:$0xff]
    %v1690 = vld [vmem:[%s3 + $0x1f0] sm:$0xff]
    %v1691 = vld [vmem:[%s3 + $0x1f8] sm:$0xff]
    %v1692 = vld [vmem:[%s4] sm:$0x3]
    %v1694 = vlaneseq
    %v1695 = vshrl.u32 %v1694, 7
    %v1696 = vsub.s32 0, %v1695
    %v1697 = vrot.slane %v1692, %v1696
    %v1698 = vlaneseq
    %v1699 = vshrl.u32 %v1698, 7
    %v1700 = vsub.s32 1, %v1699
    %v1701 = vrot.slane %v1692, %v1700
    %v1768 = vunpack.c.l.b16 %v1628
    %v1769 = vunpack.c.h.b16 %v1628
    %v1770 = vunpack.c.l.b16 %v1629
    %v1771 = vunpack.c.h.b16 %v1629
    %v1772 = vunpack.c.l.b16 %v1630
    %v1773 = vunpack.c.h.b16 %v1630
    %v1774 = vunpack.c.l.b16 %v1631
    %v1775 = vunpack.c.h.b16 %v1631
    %v1776 = vunpack.c.l.b16 %v1632
    %v1777 = vunpack.c.h.b16 %v1632
    %v1778 = vunpack.c.l.b16 %v1633
    %v1779 = vunpack.c.h.b16 %v1633
    %v1780 = vunpack.c.l.b16 %v1634
    %v1781 = vunpack.c.h.b16 %v1634
    %v1782 = vunpack.c.l.b16 %v1635
    %v1783 = vunpack.c.h.b16 %v1635
    %v1784 = vunpack.c.l.b16 %v1636
    %v1785 = vunpack.c.h.b16 %v1636
    %v1786 = vunpack.c.l.b16 %v1637
    %v1787 = vunpack.c.h.b16 %v1637
    %v1788 = vunpack.c.l.b16 %v1638
    %v1789 = vunpack.c.h.b16 %v1638
    %v1790 = vunpack.c.l.b16 %v1639
    %v1791 = vunpack.c.h.b16 %v1639
    %v1792 = vunpack.c.l.b16 %v1640
    %v1793 = vunpack.c.h.b16 %v1640
    %v1794 = vunpack.c.l.b16 %v1641
    %v1795 = vunpack.c.h.b16 %v1641
    %v1796 = vunpack.c.l.b16 %v1642
    %v1797 = vunpack.c.h.b16 %v1642
    %v1798 = vunpack.c.l.b16 %v1643
    %v1799 = vunpack.c.h.b16 %v1643
    %v1800 = vunpack.c.l.b16 %v1644
    %v1801 = vunpack.c.h.b16 %v1644
    %v1802 = vunpack.c.l.b16 %v1645
    %v1803 = vunpack.c.h.b16 %v1645
    %v1804 = vunpack.c.l.b16 %v1646
    %v1805 = vunpack.c.h.b16 %v1646
    %v1806 = vunpack.c.l.b16 %v1647
    %v1807 = vunpack.c.h.b16 %v1647
    %v1808 = vunpack.c.l.b16 %v1648
    %v1809 = vunpack.c.h.b16 %v1648
    %v1810 = vunpack.c.l.b16 %v1649
    %v1811 = vunpack.c.h.b16 %v1649
    %v1812 = vunpack.c.l.b16 %v1650
    %v1813 = vunpack.c.h.b16 %v1650
    %v1814 = vunpack.c.l.b16 %v1651
    %v1815 = vunpack.c.h.b16 %v1651
    %v1816 = vunpack.c.l.b16 %v1652
    %v1817 = vunpack.c.h.b16 %v1652
    %v1818 = vunpack.c.l.b16 %v1653
    %v1819 = vunpack.c.h.b16 %v1653
    %v1820 = vunpack.c.l.b16 %v1654
    %v1821 = vunpack.c.h.b16 %v1654
    %v1822 = vunpack.c.l.b16 %v1655
    %v1823 = vunpack.c.h.b16 %v1655
    %v1824 = vunpack.c.l.b16 %v1656
    %v1825 = vunpack.c.h.b16 %v1656
    %v1826 = vunpack.c.l.b16 %v1657
    %v1827 = vunpack.c.h.b16 %v1657
    %v1828 = vunpack.c.l.b16 %v1658
    %v1829 = vunpack.c.h.b16 %v1658
    %v1830 = vunpack.c.l.b16 %v1659
    %v1831 = vunpack.c.h.b16 %v1659
    %v1832 = vunpack.c.l.b16 %v1660
    %v1833 = vunpack.c.h.b16 %v1660
    %v1834 = vunpack.c.l.b16 %v1661
    %v1835 = vunpack.c.h.b16 %v1661
    %v1836 = vunpack.c.l.b16 %v1662
    %v1837 = vunpack.c.h.b16 %v1662
    %v1838 = vunpack.c.l.b16 %v1663
    %v1839 = vunpack.c.h.b16 %v1663
    %v1840 = vunpack.c.l.b16 %v1664
    %v1841 = vunpack.c.h.b16 %v1664
    %v1842 = vunpack.c.l.b16 %v1665
    %v1843 = vunpack.c.h.b16 %v1665
    %v1844 = vunpack.c.l.b16 %v1666
    %v1845 = vunpack.c.h.b16 %v1666
    %v1846 = vunpack.c.l.b16 %v1667
    %v1847 = vunpack.c.h.b16 %v1667
    %v1848 = vunpack.c.l.b16 %v1668
    %v1849 = vunpack.c.h.b16 %v1668
    %v1850 = vunpack.c.l.b16 %v1669
    %v1851 = vunpack.c.h.b16 %v1669
    %v1852 = vunpack.c.l.b16 %v1670
    %v1853 = vunpack.c.h.b16 %v1670
    %v1854 = vunpack.c.l.b16 %v1671
    %v1855 = vunpack.c.h.b16 %v1671
    %v1856 = vunpack.c.l.b16 %v1672
    %v1857 = vunpack.c.h.b16 %v1672
    %v1858 = vunpack.c.l.b16 %v1673
    %v1859 = vunpack.c.h.b16 %v1673
    %v1860 = vunpack.c.l.b16 %v1674
    %v1861 = vunpack.c.h.b16 %v1674
    %v1862 = vunpack.c.l.b16 %v1675
    %v1863 = vunpack.c.h.b16 %v1675
    %v1864 = vunpack.c.l.b16 %v1676
    %v1865 = vunpack.c.h.b16 %v1676
    %v1866 = vunpack.c.l.b16 %v1677
    %v1867 = vunpack.c.h.b16 %v1677
    %v1868 = vunpack.c.l.b16 %v1678
    %v1869 = vunpack.c.h.b16 %v1678
    %v1870 = vunpack.c.l.b16 %v1679
    %v1871 = vunpack.c.h.b16 %v1679
    %v1872 = vunpack.c.l.b16 %v1680
    %v1873 = vunpack.c.h.b16 %v1680
    %v1874 = vunpack.c.l.b16 %v1681
    %v1875 = vunpack.c.h.b16 %v1681
    %v1876 = vunpack.c.l.b16 %v1682
    %v1877 = vunpack.c.h.b16 %v1682
    %v1878 = vunpack.c.l.b16 %v1683
    %v1879 = vunpack.c.h.b16 %v1683
    %v1880 = vunpack.c.l.b16 %v1684
    %v1881 = vunpack.c.h.b16 %v1684
    %v1882 = vunpack.c.l.b16 %v1685
    %v1883 = vunpack.c.h.b16 %v1685
    %v1884 = vunpack.c.l.b16 %v1686
    %v1885 = vunpack.c.h.b16 %v1686
    %v1886 = vunpack.c.l.b16 %v1687
    %v1887 = vunpack.c.h.b16 %v1687
    %v1888 = vunpack.c.l.b16 %v1688
    %v1889 = vunpack.c.h.b16 %v1688
    %v1890 = vunpack.c.l.b16 %v1689
    %v1891 = vunpack.c.h.b16 %v1689
    %v1892 = vunpack.c.l.b16 %v1690
    %v1893 = vunpack.c.h.b16 %v1690
    %v1894 = vunpack.c.l.b16 %v1691
    %v1895 = vunpack.c.h.b16 %v1691
    %v1896 = vpack.c.b16 %v1770, %v1768
    %v1897 = vpack.c.b16 %v1771, %v1769
    %v1898 = vpack.c.b16 %v1774, %v1772
    %v1899 = vpack.c.b16 %v1775, %v1773
    %v1900 = vpack.c.b16 %v1778, %v1776
    %v1901 = vpack.c.b16 %v1779, %v1777
    %v1902 = vpack.c.b16 %v1782, %v1780
    %v1903 = vpack.c.b16 %v1783, %v1781
    %v1904 = vpack.c.b16 %v1786, %v1784
    %v1905 = vpack.c.b16 %v1787, %v1785
    %v1906 = vpack.c.b16 %v1790, %v1788
    %v1907 = vpack.c.b16 %v1791, %v1789
    %v1908 = vpack.c.b16 %v1794, %v1792
    %v1909 = vpack.c.b16 %v1795, %v1793
    %v1910 = vpack.c.b16 %v1798, %v1796
    %v1911 = vpack.c.b16 %v1799, %v1797
    %v1912 = vpack.c.b16 %v1802, %v1800
    %v1913 = vpack.c.b16 %v1803, %v1801
    %v1914 = vpack.c.b16 %v1806, %v1804
    %v1915 = vpack.c.b16 %v1807, %v1805
    %v1916 = vpack.c.b16 %v1810, %v1808
    %v1917 = vpack.c.b16 %v1811, %v1809
    %v1918 = vpack.c.b16 %v1814, %v1812
    %v1919 = vpack.c.b16 %v1815, %v1813
    %v1920 = vpack.c.b16 %v1818, %v1816
    %v1921 = vpack.c.b16 %v1819, %v1817
    %v1922 = vpack.c.b16 %v1822, %v1820
    %v1923 = vpack.c.b16 %v1823, %v1821
    %v1924 = vpack.c.b16 %v1826, %v1824
    %v1925 = vpack.c.b16 %v1827, %v1825
    %v1926 = vpack.c.b16 %v1830, %v1828
    %v1927 = vpack.c.b16 %v1831, %v1829
    %v1928 = vpack.c.b16 %v1834, %v1832
    %v1929 = vpack.c.b16 %v1835, %v1833
    %v1930 = vpack.c.b16 %v1838, %v1836
    %v1931 = vpack.c.b16 %v1839, %v1837
    %v1932 = vpack.c.b16 %v1842, %v1840
    %v1933 = vpack.c.b16 %v1843, %v1841
    %v1934 = vpack.c.b16 %v1846, %v1844
    %v1935 = vpack.c.b16 %v1847, %v1845
    %v1936 = vpack.c.b16 %v1850, %v1848
    %v1937 = vpack.c.b16 %v1851, %v1849
    %v1938 = vpack.c.b16 %v1854, %v1852
    %v1939 = vpack.c.b16 %v1855, %v1853
    %v1940 = vpack.c.b16 %v1858, %v1856
    %v1941 = vpack.c.b16 %v1859, %v1857
    %v1942 = vpack.c.b16 %v1862, %v1860
    %v1943 = vpack.c.b16 %v1863, %v1861
    %v1944 = vpack.c.b16 %v1866, %v1864
    %v1945 = vpack.c.b16 %v1867, %v1865
    %v1946 = vpack.c.b16 %v1870, %v1868
    %v1947 = vpack.c.b16 %v1871, %v1869
    %v1948 = vpack.c.b16 %v1874, %v1872
    %v1949 = vpack.c.b16 %v1875, %v1873
    %v1950 = vpack.c.b16 %v1878, %v1876
    %v1951 = vpack.c.b16 %v1879, %v1877
    %v1952 = vpack.c.b16 %v1882, %v1880
    %v1953 = vpack.c.b16 %v1883, %v1881
    %v1954 = vpack.c.b16 %v1886, %v1884
    %v1955 = vpack.c.b16 %v1887, %v1885
    %v1956 = vpack.c.b16 %v1890, %v1888
    %v1957 = vpack.c.b16 %v1891, %v1889
    %v1958 = vpack.c.b16 %v1894, %v1892
    %v1959 = vpack.c.b16 %v1895, %v1893
    %2024 = vmatprep.subr.bf16.mxu0 %v1911
    %2025 = vmatpush1.bf16.msra.mxu0 %v1910
    %2026 = vmatprep.subr.bf16.mxu0 %v1909
    %2027 = vmatpush1.bf16.msra.mxu0 %v1908
    %2028 = vmatprep.subr.bf16.mxu0 %v1907
    %2029 = vmatpush1.bf16.msra.mxu0 %v1906
    %2030 = vmatprep.subr.bf16.mxu0 %v1905
    %2031 = vmatpush1.bf16.msra.mxu0 %v1904
    %2032 = vmatprep.subr.bf16.mxu0 %v1903
    %2033 = vmatpush1.bf16.msra.mxu0 %v1902
    %2034 = vmatprep.subr.bf16.mxu0 %v1901
    %2035 = vmatpush1.bf16.msra.mxu0 %v1900
    %2036 = vmatprep.subr.bf16.mxu0 %v1899
    %2037 = vmatpush1.bf16.msra.mxu0 %v1898
    %2038 = vmatprep.subr.bf16.mxu0 %v1897
    %2039 = vmatpush1.bf16.msra.mxu0 %v1896
    %2040 = vmatprep.subr.bf16.mxu0 %v1927
    %2041 = vmatpush2.bf16.msra.mxu0 %v1926
    %2042 = vmatprep.subr.bf16.mxu0 %v1925
    %2043 = vmatpush2.bf16.msra.mxu0 %v1924
    %2044 = vmatprep.subr.bf16.mxu0 %v1923
    %2045 = vmatpush2.bf16.msra.mxu0 %v1922
    %2046 = vmatprep.subr.bf16.mxu0 %v1921
    %2047 = vmatpush2.bf16.msra.mxu0 %v1920
    %2048 = vmatprep.subr.bf16.mxu0 %v1919
    %2049 = vmatpush2.bf16.msra.mxu0 %v1918
    %2050 = vmatprep.subr.bf16.mxu0 %v1917
    %2051 = vmatpush2.bf16.msra.mxu0 %v1916
    %2052 = vmatprep.subr.bf16.mxu0 %v1915
    %2053 = vmatpush2.bf16.msra.mxu0 %v1914
    %2054 = vmatprep.subr.bf16.mxu0 %v1913
    %2055 = vmatpush2.bf16.msra.mxu0 %v1912
    %2056 = vmatprep.mubr.bf16.mxu0 %v1625
    %2057 = vmatmul.mubr.bf16.gmra.mxu0 %v1624
    %v2058 = vpop.f32.mrf.mxu0
    %v2059 = vadd.f32 %v1697, %v2058
    %v2060 = vpop.f32.mrf.mxu0
    %v2061 = vadd.f32 %v1701, %v2060
    %v2062 = vpop.f32.mrf.mxu0
    %v2063 = vpop.f32.mrf.mxu0
    %2064 = vdwg.mxu0
    %2065 = vmatprep.subr.bf16.mxu0 %v1943
    %2066 = vmatpush1.bf16.msra.mxu0 %v1942
    %2067 = vmatprep.subr.bf16.mxu0 %v1941
    %2068 = vmatpush1.bf16.msra.mxu0 %v1940
    %2069 = vmatprep.subr.bf16.mxu0 %v1939
    %2070 = vmatpush1.bf16.msra.mxu0 %v1938
    %2071 = vmatprep.subr.bf16.mxu0 %v1937
    %2072 = vmatpush1.bf16.msra.mxu0 %v1936
    %2073 = vmatprep.subr.bf16.mxu0 %v1935
    %2074 = vmatpush1.bf16.msra.mxu0 %v1934
    %2075 = vmatprep.subr.bf16.mxu0 %v1933
    %2076 = vmatpush1.bf16.msra.mxu0 %v1932
    %2077 = vmatprep.subr.bf16.mxu0 %v1931
    %2078 = vmatpush1.bf16.msra.mxu0 %v1930
    %2079 = vmatprep.subr.bf16.mxu0 %v1929
    %2080 = vmatpush1.bf16.msra.mxu0 %v1928
    %2081 = vmatprep.subr.bf16.mxu0 %v1959
    %2082 = vmatpush2.bf16.msra.mxu0 %v1958
    %2083 = vmatprep.subr.bf16.mxu0 %v1957
    %2084 = vmatpush2.bf16.msra.mxu0 %v1956
    %2085 = vmatprep.subr.bf16.mxu0 %v1955
    %2086 = vmatpush2.bf16.msra.mxu0 %v1954
    %2087 = vmatprep.subr.bf16.mxu0 %v1953
    %2088 = vmatpush2.bf16.msra.mxu0 %v1952
    %2089 = vmatprep.subr.bf16.mxu0 %v1951
    %2090 = vmatpush2.bf16.msra.mxu0 %v1950
    %2091 = vmatprep.subr.bf16.mxu0 %v1949
    %2092 = vmatpush2.bf16.msra.mxu0 %v1948
    %2093 = vmatprep.subr.bf16.mxu0 %v1947
    %2094 = vmatpush2.bf16.msra.mxu0 %v1946
    %2095 = vmatprep.subr.bf16.mxu0 %v1945
    %2096 = vmatpush2.bf16.msra.mxu0 %v1944
    %2097 = vmatprep.mubr.bf16.mxu0 %v1627
    %2098 = vmatmul.mubr.bf16.gmra.mxu0 %v1626
    %v2099 = vpop.f32.mrf.mxu0
    %v2100 = vadd.f32 %v2059, %v2099
    %v2101 = vpop.f32.mrf.mxu0
    %v2102 = vadd.f32 %v2061, %v2101
    %v2103 = vpop.f32.mrf.mxu0
    %v2104 = vpop.f32.mrf.mxu0
    %2105 = vdwg.mxu0
    %v2106 = vmax.f32 %v2100, 0.0
    %v2107 = vmax.f32 %v2102, 0.0
    %v2108 = vpack.c.bf16 %v2106, %v2106
    %v2109 = vpack.c.bf16 %v2107, %v2107
    %v2110 = vld [vmem:[#allocation5] sm:$0xf]
    %v2111 = vld [vmem:[#allocation5 + $0x4] sm:$0xf]
    %v2112 = vld [vmem:[#allocation5 + $0x8] sm:$0xf]
    %v2113 = vld [vmem:[#allocation5 + $0xc] sm:$0xf]
    %v2114 = vld [vmem:[#allocation5 + $0x10] sm:$0xf]
    %v2115 = vld [vmem:[#allocation5 + $0x14] sm:$0xf]
    %v2116 = vld [vmem:[#allocation5 + $0x18] sm:$0xf]
    %v2117 = vld [vmem:[#allocation5 + $0x1c] sm:$0xf]
    %v2118 = vld [vmem:[#allocation5 + $0x20] sm:$0xf]
    %v2119 = vld [vmem:[#allocation5 + $0x24] sm:$0xf]
    %v2120 = vld [vmem:[#allocation5 + $0x28] sm:$0xf]
    %v2121 = vld [vmem:[#allocation5 + $0x2c] sm:$0xf]
    %v2122 = vld [vmem:[#allocation5 + $0x30] sm:$0xf]
    %v2123 = vld [vmem:[#allocation5 + $0x34] sm:$0xf]
    %v2124 = vld [vmem:[#allocation5 + $0x38] sm:$0xf]
    %v2125 = vld [vmem:[#allocation5 + $0x3c] sm:$0xf]
    %v2126 = vld [vmem:[#allocation5 + $0x40] sm:$0xf]
    %v2127 = vld [vmem:[#allocation5 + $0x44] sm:$0xf]
    %v2128 = vld [vmem:[#allocation5 + $0x48] sm:$0xf]
    %v2129 = vld [vmem:[#allocation5 + $0x4c] sm:$0xf]
    %v2130 = vld [vmem:[#allocation5 + $0x50] sm:$0xf]
    %v2131 = vld [vmem:[#allocation5 + $0x54] sm:$0xf]
    %v2132 = vld [vmem:[#allocation5 + $0x58] sm:$0xf]
    %v2133 = vld [vmem:[#allocation5 + $0x5c] sm:$0xf]
    %v2134 = vld [vmem:[#allocation5 + $0x60] sm:$0xf]
    %v2135 = vld [vmem:[#allocation5 + $0x64] sm:$0xf]
    %v2136 = vld [vmem:[#allocation5 + $0x68] sm:$0xf]
    %v2137 = vld [vmem:[#allocation5 + $0x6c] sm:$0xf]
    %v2138 = vld [vmem:[#allocation5 + $0x70] sm:$0xf]
    %v2139 = vld [vmem:[#allocation5 + $0x74] sm:$0xf]
    %v2140 = vld [vmem:[#allocation5 + $0x78] sm:$0xf]
    %v2141 = vld [vmem:[#allocation5 + $0x7c] sm:$0xf]
    %v2142 = vld [vmem:[%s6] sm:$0x1]
    %v2144 = vlaneseq
    %v2145 = vshrl.u32 %v2144, 7
    %v2146 = vsub.s32 0, %v2145
    %v2147 = vrot.slane %v2142, %v2146
    %v2181 = vunpack.c.l.b16 %v2110
    %v2182 = vunpack.c.l.b16 %v2111
    %v2183 = vunpack.c.l.b16 %v2112
    %v2184 = vunpack.c.l.b16 %v2113
    %v2185 = vunpack.c.l.b16 %v2114
    %v2186 = vunpack.c.l.b16 %v2115
    %v2187 = vunpack.c.l.b16 %v2116
    %v2188 = vunpack.c.l.b16 %v2117
    %v2189 = vunpack.c.l.b16 %v2118
    %v2190 = vunpack.c.l.b16 %v2119
    %v2191 = vunpack.c.l.b16 %v2120
    %v2192 = vunpack.c.l.b16 %v2121
    %v2193 = vunpack.c.l.b16 %v2122
    %v2194 = vunpack.c.l.b16 %v2123
    %v2195 = vunpack.c.l.b16 %v2124
    %v2196 = vunpack.c.l.b16 %v2125
    %v2197 = vunpack.c.l.b16 %v2126
    %v2198 = vunpack.c.l.b16 %v2127
    %v2199 = vunpack.c.l.b16 %v2128
    %v2200 = vunpack.c.l.b16 %v2129
    %v2201 = vunpack.c.l.b16 %v2130
    %v2202 = vunpack.c.l.b16 %v2131
    %v2203 = vunpack.c.l.b16 %v2132
    %v2204 = vunpack.c.l.b16 %v2133
    %v2205 = vunpack.c.l.b16 %v2134
    %v2206 = vunpack.c.l.b16 %v2135
    %v2207 = vunpack.c.l.b16 %v2136
    %v2208 = vunpack.c.l.b16 %v2137
    %v2209 = vunpack.c.l.b16 %v2138
    %v2210 = vunpack.c.l.b16 %v2139
    %v2211 = vunpack.c.l.b16 %v2140
    %v2212 = vunpack.c.l.b16 %v2141
    %v2213 = vpack.c.b16 %v2182, %v2181
    %v2214 = vpack.c.b16 %v2184, %v2183
    %v2215 = vpack.c.b16 %v2186, %v2185
    %v2216 = vpack.c.b16 %v2188, %v2187
    %v2217 = vpack.c.b16 %v2190, %v2189
    %v2218 = vpack.c.b16 %v2192, %v2191
    %v2219 = vpack.c.b16 %v2194, %v2193
    %v2220 = vpack.c.b16 %v2196, %v2195
    %v2221 = vpack.c.b16 %v2198, %v2197
    %v2222 = vpack.c.b16 %v2200, %v2199
    %v2223 = vpack.c.b16 %v2202, %v2201
    %v2224 = vpack.c.b16 %v2204, %v2203
    %v2225 = vpack.c.b16 %v2206, %v2205
    %v2226 = vpack.c.b16 %v2208, %v2207
    %v2227 = vpack.c.b16 %v2210, %v2209
    %v2228 = vpack.c.b16 %v2212, %v2211
    %2245 = vmatprep.subr.bf16.mxu0 0
    %2246 = vmatpush1.bf16.msra.mxu0 %v2220
    %2247 = vmatprep.subr.bf16.mxu0 0
    %2248 = vmatpush1.bf16.msra.mxu0 %v2219
    %2249 = vmatprep.subr.bf16.mxu0 0
    %2250 = vmatpush1.bf16.msra.mxu0 %v2218
    %2251 = vmatprep.subr.bf16.mxu0 0
    %2252 = vmatpush1.bf16.msra.mxu0 %v2217
    %2253 = vmatprep.subr.bf16.mxu0 0
    %2254 = vmatpush1.bf16.msra.mxu0 %v2216
    %2255 = vmatprep.subr.bf16.mxu0 0
    %2256 = vmatpush1.bf16.msra.mxu0 %v2215
    %2257 = vmatprep.subr.bf16.mxu0 0
    %2258 = vmatpush1.bf16.msra.mxu0 %v2214
    %2259 = vmatprep.subr.bf16.mxu0 0
    %2260 = vmatpush1.bf16.msra.mxu0 %v2213
    %2261 = vmatprep.subr.bf16.mxu0 0
    %2262 = vmatpush2.bf16.msra.mxu0 %v2228
    %2263 = vmatprep.subr.bf16.mxu0 0
    %2264 = vmatpush2.bf16.msra.mxu0 %v2227
    %2265 = vmatprep.subr.bf16.mxu0 0
    %2266 = vmatpush2.bf16.msra.mxu0 %v2226
    %2267 = vmatprep.subr.bf16.mxu0 0
    %2268 = vmatpush2.bf16.msra.mxu0 %v2225
    %2269 = vmatprep.subr.bf16.mxu0 0
    %2270 = vmatpush2.bf16.msra.mxu0 %v2224
    %2271 = vmatprep.subr.bf16.mxu0 0
    %2272 = vmatpush2.bf16.msra.mxu0 %v2223
    %2273 = vmatprep.subr.bf16.mxu0 0
    %2274 = vmatpush2.bf16.msra.mxu0 %v2222
    %2275 = vmatprep.subr.bf16.mxu0 0
    %2276 = vmatpush2.bf16.msra.mxu0 %v2221
    %2277 = vmatprep.mubr.bf16.mxu0 %v2109
    %2278 = vmatmul.mubr.bf16.gmra.mxu0 %v2108
    %v2279 = vpop.f32.mrf.mxu0
    %v2280 = vadd.f32 %v2147, %v2279
    %v2281 = vpop.f32.mrf.mxu0
    %v2282 = vpop.f32.mrf.mxu0
    %v2283 = vpop.f32.mrf.mxu0
    %2284 = vdwg.mxu0
    %2285 = vst [vmem:[#allocation7] sm:$0xff] %v2280
    %v2286 = vld [vmem:[%s7] sm:$0xff]
    %v2287 = vsub.f32 %v2280, %v2286
    %p2288 = scmp.eq.s32.totalorder 0, 0
    // Predicated region
    $region42: #{mlp_forward.1} parent=1 // pred_check
      %p2289 = pneg %p2288
    $region43: #{mlp_forward.1} parent=1 // pred_check_branch
      %2291 = sbr.rel (%p2289) target = $region45
    $region44: #{mlp_forward.1} parent=1 // pred_region
      %vm2292 = vcmask 0
      %2293 = vst.msk [vmem:[#allocation8] sm:$0x1] %vm2292, 0.0
    $region45: #{mlp_forward.1} parent=1 // pred_fallthru
      _
    %v2294 = vld [vmem:[#allocation8] sm:$0x1]
    %v2295 = vmul.f32 %v2287, %v2287
    %2296 = vadd.xlane.f32.xlu0 %v2295
    %v2297 = vpop.xlane.xlu0 %2296
    %v2298 = vrot.slane %v2297, 4
    %v2299 = vadd.f32 %v2297, %v2298
    %v2300 = vrot.slane %v2299, 2
    %v2301 = vadd.f32 %v2299, %v2300
    %v2302 = vrot.slane %v2301, 1
    %v2303 = vadd.f32 %v2301, %v2302
    %s2304 = vtos %v2303
    %v2305 = vstv %s2304
    %v2306 = vadd.f32 %v2294, %v2305
    %vm2307 = vcmask 0
    %2308 = vst.msk [vmem:[#allocation8] sm:$0x1] %vm2307, %v2306
    // Predicated region
    $region46: #{mlp_forward.1} parent=1 // pred_check
      %p2309 = pneg %p2288
    $region47: #{mlp_forward.1} parent=1 // pred_check_branch
      %2311 = sbr.rel (%p2309) target = $region49
    $region48: #{mlp_forward.1} parent=1 // pred_region
      %v2312 = vld [vmem:[#allocation8] sm:$0x1]
      %v2313 = vrsqrt.pop %v2312
      %v2314 = vmul.f32 %v2312, %v2313
      %vm2315 = vcmp.eq.f32.partialorder %v2312, inf
      %v2316 = vsel %vm2315, %v2312, %v2314
      %vm2317 = vcmp.eq.f32.partialorder %v2312, 0.0
      %v2318 = vand.u32 %v2312, 2147483648
      %v2319 = vsel %vm2317, %v2318, %v2316
      %2320 = vst.msk [vmem:[#allocation8] sm:$0x1] %vm2307, %v2319
    $region49: #{mlp_forward.1} parent=1 // pred_fallthru
      _
    // Predicated region
    $region50: #{mlp_forward.1} parent=1 // pred_check
      _
    $region51: #{mlp_forward.1} parent=1 // pred_check_branch
      %2322 = sbr.rel (0) target = $region53
    $region52: #{mlp_forward.1} parent=1 // pred_region
      %s2324 = ssub.s32 128, 128
      %2325 = vsyncadd [#allocation4], %s2324
      %s2327 = sshll.u32 [#allocation7], 4
      %s2328 = int_to_ptr.vmem [resolvable:$true] %s2327
      %2330 = dma.vmem_to_hbm [thread:$0]  %s2328, 128, %s8, [#allocation4]
    $region53: #{mlp_forward.1} parent=1 // pred_fallthru
      _
    // Predicated region
    $region54: #{mlp_forward.1} parent=1 // pred_check
      _
    $region55: #{mlp_forward.1} parent=1 // pred_check_branch
      %2332 = sbr.rel (0) target = $region57
    $region56: #{mlp_forward.1} parent=1 // pred_region
      %s2334 = ssub.s32 16, 16
      %2335 = vsyncadd [#allocation9], %s2334
      %s2337 = sshll.u32 [#allocation8], 4
      %s2338 = int_to_ptr.vmem [resolvable:$true] %s2337
      %2340 = dma.vmem_to_hbm [thread:$0]  %s2338, 16, %s9, [#allocation9]
    $region57: #{mlp_forward.1} parent=1 // pred_fallthru
      _
    // Predicated region
    $region58: #{mlp_forward.1} parent=1 // pred_check
      _
    $region59: #{mlp_forward.1} parent=1 // pred_check_branch
      %2342 = sbr.rel (0) target = $region61
    $region60: #{mlp_forward.1} parent=1 // pred_region
      %2343 = dma.done [#allocation4], 128
    $region61: #{mlp_forward.1} parent=1 // pred_fallthru
      _
    // Predicated region
    $region62: #{mlp_forward.1} parent=1 // pred_check
      _
    $region63: #{mlp_forward.1} parent=1 // pred_check_branch
      %2345 = sbr.rel (0) target = $region65
    $region64: #{mlp_forward.1} parent=1 // pred_region
      %2346 = dma.done [#allocation9], 16
    $region65: #{mlp_forward.1} parent=1 // pred_fallthru
      _
    %2347 = vsyncpa [#allocation3], 1
    %2348 = vsyncpa [#allocation6], 1
    %2349 = vsyncpa [#allocation4], 1
    %2350 = vsyncpa [#allocation9], 1

</llo_original>
